<compile_context>
chip_gen: v6e
topology: v6e:2x2x1
jax: 0.10.0
libtpu: 0.0.40
codegen_flags: <defaults>
</compile_context>

<pallas_src>
import math

import jax
import jax.numpy as jnp
from jax.experimental import pallas as pl
from jax.experimental.pallas import tpu as pltpu

# ----------------- static, scaled-down configuration -----------------
E = 32          # embedding_dim
H = 64          # hidden_dim
D2 = 2 * H      # hidden_dim * 2
V = 512         # max_items + 1   (max_items = 511)
B = 4           # batch of users
N = 5           # orders per user   (static stand-in for ragged lists)
L = 6           # items per order   (static)
NHEADS = 4
BASKET = 10
EPS = 1e-5      # PyTorch LayerNorm default eps
VALUE_PAD = 128  # lane-dense critic output width (col 0 holds the value)

# -------- named row offsets: (22, H) f32 slab (critic + encoder tail) ------
C_B1, C_G1, C_BE1 = 0, 1, 2            # critic Linear(H,H) bias, LN gamma/beta
C_RB1, C_RG1, C_RBE1 = 3, 4, 5         # critic ResidualBlock first Linear + LN
C_RB2, C_RG2, C_RBE2 = 6, 7, 8         # critic ResidualBlock second Linear + LN
C_W2, C_B2 = 9, 10                     # critic final Linear(H,1) weight row, bias@col0
TE_W1A, TE_W1B = 11, 12                # temporal Linear(2,H/4) weight rows (cols :H/4)
TE_B1, TE_G1, TE_BE1 = 13, 14, 15      # temporal layer-1 bias, LN gamma/beta (cols :H/4)
TE_B2, TE_G2, TE_BE2 = 16, 17, 18      # temporal layer-2 bias, LN gamma/beta (cols :H/2)
CB_B, CB_G, CB_BE = 19, 20, 21         # combiner bias, LN gamma/beta
VEC64_ROWS = 22

# -------- named row offsets: (12, 2H) f32 slab (actor head) ----------------
A_B1, A_G1, A_BE1 = 0, 1, 2
A_RB1, A_RG1, A_RBE1 = 3, 4, 5
A_RB2, A_RG2, A_RBE2 = 6, 7, 8
A_B2, A_G2, A_BE2 = 9, 10, 11
AVEC_ROWS = 12

# -------- tail_w (48, H) f32 slab layout ------------------------------------
# rows 0:16,  cols 0:H//2  -> temporal Linear(H/4, H/2) weight (16, 32)
# rows 16:48, all cols     -> combiner weight rows [2H : 2H + H/2]  (32, 64)
TAILW_ROWS = 48


# ----------------------------- helpers --------------------------------
def layer_norm(x, g, b):
    mu = jnp.mean(x, axis=-1, keepdims=True)
    var = jnp.mean((x - mu) ** 2, axis=-1, keepdims=True)
    return (x - mu) * jax.lax.rsqrt(var + EPS) * g + b


def _bf16_dot(x_f32, w_bf16):
    # bf16 x bf16 MXU matmul with f32 accumulation.
    return jnp.dot(x_f32.astype(jnp.bfloat16), w_bf16,
                   preferred_element_type=jnp.float32)


# =======================================================================
#  Fused Pallas kernel: encoder tail + actor head + critic head
# =======================================================================
def _heads_kernel(enc_ref, temp_ref,
                  w_in_ref,            # bf16 (H, 2H+H): [actor Linear(H,2H) | critic Linear(H,H)]
                  a_ws_ref,            # bf16 (4, 2H, 2H): [ar_w1, ar_w2, a_w2, cb_w_top(pad)]
                  a_w3_ref,            # bf16 (2H, V)
                  c_ws_ref,            # bf16 (2, H, H): [cr_w1, cr_w2]
                  a_vec_ref,           # f32 (12, 2H) actor bias/LN slab
                  a_b3_ref,            # f32 (1, V) actor final bias
                  vec64_ref,           # f32 (22, H) critic + tail bias/LN/weight-row slab
                  tail_w_ref,          # f32 (48, H) temporal L2 weight + combiner bottom
                  probs_ref, value_ref):
    enc = enc_ref[...]                           # (B, 2H) f32 order encoding
    tf = temp_ref[...]                           # (B, 2)  f32 [days_mean, recency]
    av = a_vec_ref[...]                          # (12, 2H) f32
    v64 = vec64_ref[...]                         # (22, H) f32
    H_ = v64.shape[-1]
    QH, HH = H_ // 4, H_ // 2                    # 16, 32

    def row(slab, r, width=None):
        s = slab[r:r + 1]
        return s if width is None else s[:, :width]

    # ---------------- encoder tail: temporal MLP + combiner ----------------
    # Linear(2, H/4) as explicit broadcast mul-add (avoids a degenerate K=2 MXU push)
    t1 = (tf[:, 0:1] * row(v64, TE_W1A, QH)
          + tf[:, 1:2] * row(v64, TE_W1B, QH)
          + row(v64, TE_B1, QH))
    t1 = jnp.maximum(layer_norm(t1, row(v64, TE_G1, QH), row(v64, TE_BE1, QH)), 0.0)
    # Linear(H/4, H/2)
    t2 = jnp.dot(t1, tail_w_ref[0:QH, 0:HH],
                 preferred_element_type=jnp.float32) + row(v64, TE_B2, HH)
    t2 = jnp.maximum(layer_norm(t2, row(v64, TE_G2, HH), row(v64, TE_BE2, HH)), 0.0)
    # combiner Linear(2H + H/2, H): split as enc @ top  +  t2 @ bottom (no concat)
    u = _bf16_dot(enc, a_ws_ref[3])[:, :H_]
    u = u + jnp.dot(t2, tail_w_ref[QH:QH + HH, :],
                    preferred_element_type=jnp.float32)
    u = u + row(v64, CB_B)
    x = jnp.maximum(layer_norm(u, row(v64, CB_G), row(v64, CB_BE)), 0.0)   # (B, H)

    # ---------------- fused first linear of actor + critic ------------------
    hx = _bf16_dot(x, w_in_ref[...])             # (B, 2H + H) f32
    D2_ = hx.shape[-1] - H_                      # 2H

    # ---------------- actor ----------------
    # Linear(H, 2H) -> LN -> ReLU  (Dropout = identity at inference)
    h = hx[:, :D2_] + row(av, A_B1)
    h = jnp.maximum(layer_norm(h, row(av, A_G1), row(av, A_BE1)), 0.0)
    # ResidualBlock(2H): Linear -> LN -> ReLU -> Linear -> LN; out = h + block(h)
    r = _bf16_dot(h, a_ws_ref[0]) + row(av, A_RB1)
    r = jnp.maximum(layer_norm(r, row(av, A_RG1), row(av, A_RBE1)), 0.0)
    r = _bf16_dot(r, a_ws_ref[1]) + row(av, A_RB2)
    r = layer_norm(r, row(av, A_RG2), row(av, A_RBE2))
    h = h + r
    # Linear(2H, 2H) -> LN -> ReLU
    h = _bf16_dot(h, a_ws_ref[2]) + row(av, A_B2)
    h = jnp.maximum(layer_norm(h, row(av, A_G2), row(av, A_BE2)), 0.0)
    # Linear(2H, V) -> Softmax(dim=-1)  (exact division: rows must sum to 1)
    logits = _bf16_dot(h, a_w3_ref[...]) + a_b3_ref[...]
    m = jnp.max(logits, axis=-1, keepdims=True)
    e = jnp.exp(logits - m)
    probs_ref[...] = e / jnp.sum(e, axis=-1, keepdims=True)

    # ---------------- critic ----------------
    hc = hx[:, D2_:] + row(v64, C_B1)
    hc = jnp.maximum(layer_norm(hc, row(v64, C_G1), row(v64, C_BE1)), 0.0)
    rc = _bf16_dot(hc, c_ws_ref[0]) + row(v64, C_RB1)
    rc = jnp.maximum(layer_norm(rc, row(v64, C_RG1), row(v64, C_RBE1)), 0.0)
    rc = _bf16_dot(rc, c_ws_ref[1]) + row(v64, C_RB2)
    rc = layer_norm(rc, row(v64, C_RG2), row(v64, C_RBE2))
    hc = hc + rc
    # Linear(H, 1) as a VPU/XLU lane reduction; write lane-dense (B, 128).
    val = jnp.sum(hc * row(v64, C_W2), axis=-1, keepdims=True) \
        + v64[C_B2:C_B2 + 1, 0:1]
    value_ref[...] = jnp.broadcast_to(val, value_ref.shape)


def heads_forward(order_enc, temporal, p):
    Bsz = order_enc.shape[0]
    args = (order_enc, temporal,
            p['w_in'], p['a_wslab'], p['a_w3'], p['c_wslab'],
            p['a_vec'], p['a_b3'], p['vec64'], p['tail_w'])
    # advisory cost estimate (matmul flops + exp count + bytes moved)
    mm_cols = (2 * (H // 4) + (H // 4) * (H // 2) + (D2 + H // 2) * H   # tail
               + H * (D2 + H)                                           # fused first linear
               + 3 * D2 * D2 + D2 * V                                   # actor
               + 2 * H * H + H)                                         # critic
    flops = 2 * Bsz * mm_cols
    bytes_accessed = (sum(int(a.size) * a.dtype.itemsize for a in args)
                      + Bsz * (V + VALUE_PAD) * 4)
    probs, value_pad = pl.pallas_call(
        _heads_kernel,
        out_shape=(jax.ShapeDtypeStruct((Bsz, V), jnp.float32),
                   jax.ShapeDtypeStruct((Bsz, VALUE_PAD), jnp.float32)),
        in_specs=[pl.BlockSpec(memory_space=pltpu.MemorySpace.VMEM)] * len(args),
        out_specs=(pl.BlockSpec(memory_space=pltpu.MemorySpace.VMEM),
                   pl.BlockSpec(memory_space=pltpu.MemorySpace.VMEM)),
        compiler_params=pltpu.CompilerParams(
            vmem_limit_bytes=4 * 1024 * 1024),
        cost_estimate=pl.CostEstimate(flops=flops,
                                      transcendentals=Bsz * (V + 16 * H),
                                      bytes_accessed=bytes_accessed),
    )(*args)
    return probs, value_pad[:, :1]


# =======================================================================
#  NextBasketEncoder body (plain JAX glue, explicitly batched, static shapes)
# =======================================================================
def batched_mha(x, wq, bq, wk, bk, wv, bv, wo, bo, nheads):
    # x: (..., T, D); self-attention matching nn.MultiheadAttention(batch_first)
    *lead, T, D = x.shape
    hd = D // nheads
    q = (x @ wq + bq).reshape(*lead, T, nheads, hd)
    k = (x @ wk + bk).reshape(*lead, T, nheads, hd)
    v = (x @ wv + bv).reshape(*lead, T, nheads, hd)
    s = jnp.einsum('...thd,...shd->...hts', q, k) / math.sqrt(hd)
    a = jax.nn.softmax(s, axis=-1)
    o = jnp.einsum('...hts,...shd->...thd', a, v).reshape(*lead, T, D)
    return o @ wo + bo


def gru_dir_batched(x_seq, h0, w_ih, w_hh, b_ih, b_hh):
    # PyTorch GRU cell, batched. x_seq: (T, B, E); h0: (B, H)
    hdim = h0.shape[-1]

    def step(h, x):
        gi = x @ w_ih + b_ih                      # (B, 3H)
        gh = h @ w_hh + b_hh                      # (B, 3H)
        r = jax.nn.sigmoid(gi[:, :hdim] + gh[:, :hdim])
        z = jax.nn.sigmoid(gi[:, hdim:2 * hdim] + gh[:, hdim:2 * hdim])
        n = jnp.tanh(gi[:, 2 * hdim:] + r * gh[:, 2 * hdim:])
        h_new = (1.0 - z) * n + z * h
        return h_new, h_new

    _, ys = jax.lax.scan(step, h0, x_seq)
    return ys                                     # (T, B, H)


def encoder_forward(p, order_history, days_between, days_since_last):
    """Returns order_encoding (B, 2H) and temporal features (B, 2); the
    temporal MLP + combiner tail are fused into the Pallas head kernel."""
    Bsz, Nn, Ll = order_history.shape

    # item embedding (padding_idx=0 row is zeroed)
    item_emb = p['emb'][order_history.reshape(Bsz * Nn, Ll)]        # (B*N, L, E)
    # per-order item self-attention (len(order) > 1 branch), one batched MHA
    attn = batched_mha(item_emb,
                       p['ia_wq'], p['ia_bq'], p['ia_wk'], p['ia_bk'],
                       p['ia_wv'], p['ia_bv'], p['ia_wo'], p['ia_bo'],
                       NHEADS)                                       # (B*N, L, E)
    order_emb = attn.mean(axis=1).reshape(Bsz, Nn, E)                # (B, N, E)

    # bidirectional GRU over the order sequence, batched over users (time-major)
    x_tm = order_emb.transpose(1, 0, 2)                              # (N, B, E)
    h0 = jnp.zeros((Bsz, H), jnp.float32)
    fwd = gru_dir_batched(x_tm, h0, p['gru_wih_f'], p['gru_whh_f'],
                          p['gru_bih_f'], p['gru_bhh_f'])            # (N, B, H)
    bwd = gru_dir_batched(x_tm[::-1], h0, p['gru_wih_b'], p['gru_whh_b'],
                          p['gru_bih_b'], p['gru_bhh_b'])[::-1]
    gru_out = jnp.concatenate([fwd, bwd], axis=-1).transpose(1, 0, 2)  # (B, N, 2H)

    # TransformerEncoderLayer (post-norm, relu, dropout=identity), batched
    x = gru_out
    a = batched_mha(x, p['t_wq'], p['t_bq'], p['t_wk'], p['t_bk'],
                    p['t_wv'], p['t_bv'], p['t_wo'], p['t_bo'], NHEADS)
    x = layer_norm(x + a, p['t_ln1_g'], p['t_ln1_b'])
    ff = jnp.maximum(x @ p['t_ffw1'] + p['t_ffb1'], 0.0) @ p['t_ffw2'] + p['t_ffb2']
    x = layer_norm(x + ff, p['t_ln2_g'], p['t_ln2_b'])
    order_encoding = x.mean(axis=1)                                  # (B, 2H)

    # temporal features: [mean(days_between), days_since_last]
    # (std is computed in the PyTorch code but unused by temporal_encoder input)
    temporal = jnp.stack([days_between.mean(axis=1), days_since_last], axis=1)  # (B, 2)
    return order_encoding, temporal


def next_basket_predictor_forward(p, order_history, days_between, days_since_last):
    order_encoding, temporal = encoder_forward(
        p, order_history, days_between, days_since_last)
    item_probs, value = heads_forward(order_encoding, temporal, p)   # (B, V), (B, 1)
    return item_probs, value


# =======================================================================
#  deterministic parameter construction (packed-slab layout)
# =======================================================================
def make_params(key):
    keys = iter(jax.random.split(key, 128))

    def w(shape, scale=0.05):
        return (scale * jax.random.normal(next(keys), shape)).astype(jnp.float32)

    def wbf16(shape, scale=0.05):
        return w(shape, scale).astype(jnp.bfloat16)

    def zeros(shape):
        return jnp.zeros(shape, jnp.float32)

    def ones(shape):
        return jnp.ones(shape, jnp.float32)

    p = {}
    # ---- encoder body (plain JAX, f32) ----
    emb = w((V, E))
    p['emb'] = emb.at[0].set(0.0)                       # padding_idx=0
    for n in ('ia_wq', 'ia_wk', 'ia_wv', 'ia_wo'):
        p[n] = w((E, E))
    for n in ('ia_bq', 'ia_bk', 'ia_bv', 'ia_bo'):
        p[n] = zeros((E,))
    for d in ('f', 'b'):
        p[f'gru_wih_{d}'] = w((E, 3 * H))
        p[f'gru_whh_{d}'] = w((H, 3 * H))
        p[f'gru_bih_{d}'] = zeros((3 * H,))
        p[f'gru_bhh_{d}'] = zeros((3 * H,))
    for n in ('t_wq', 't_wk', 't_wv', 't_wo'):
        p[n] = w((D2, D2))
    for n in ('t_bq', 't_bk', 't_bv', 't_bo'):
        p[n] = zeros((D2,))
    p['t_ln1_g'], p['t_ln1_b'] = ones((D2,)), zeros((D2,))
    p['t_ffw1'], p['t_ffb1'] = w((D2, 4 * H)), zeros((4 * H,))
    p['t_ffw2'], p['t_ffb2'] = w((4 * H, D2)), zeros((D2,))
    p['t_ln2_g'], p['t_ln2_b'] = ones((D2,)), zeros((D2,))

    # ---- fused kernel parameters (encoder tail + actor + critic) ----
    te_w1 = w((2, H // 4))
    te_w2 = w((H // 4, H // 2))
    cb_w = w((D2 + H // 2, H))
    a_w1 = wbf16((H, D2))
    ar_w1, ar_w2, a_w2 = wbf16((D2, D2)), wbf16((D2, D2)), wbf16((D2, D2))
    a_w3 = wbf16((D2, V))
    c_w1 = wbf16((H, H))
    cr_w1, cr_w2 = wbf16((H, H)), wbf16((H, H))
    c_w2_row = w((H,))                                  # final critic Linear(H,1)

    # fused first linear (shared input x): [actor (H,2H) | critic (H,H)]
    p['w_in'] = jnp.concatenate([a_w1, c_w1], axis=1)   # (H, 2H+H) bf16
    # stacked actor slab + combiner top (padded to 2H cols, extra cols unused)
    cb_top = jnp.zeros((D2, D2), jnp.bfloat16).at[:, :H].set(
        cb_w[:D2].astype(jnp.bfloat16))
    p['a_wslab'] = jnp.stack([ar_w1, ar_w2, a_w2, cb_top])   # (4, 2H, 2H) bf16
    p['a_w3'] = a_w3                                          # (2H, V) bf16
    p['c_wslab'] = jnp.stack([cr_w1, cr_w2])                  # (2, H, H) bf16

    # actor bias/LN slab (rows per named offsets; LN gammas = 1)
    a_vec = jnp.zeros((AVEC_ROWS, D2), jnp.float32)
    a_vec = a_vec.at[jnp.array([A_G1, A_RG1, A_RG2, A_G2])].set(1.0)
    p['a_vec'] = a_vec
    p['a_b3'] = zeros((1, V))

    # critic + encoder-tail slab (rows per named offsets)
    v64 = jnp.zeros((VEC64_ROWS, H), jnp.float32)
    v64 = v64.at[jnp.array([C_G1, C_RG1, C_RG2, TE_G1, TE_G2, CB_G])].set(1.0)
    v64 = v64.at[C_W2].set(c_w2_row)
    v64 = v64.at[TE_W1A, :H // 4].set(te_w1[0])
    v64 = v64.at[TE_W1B, :H // 4].set(te_w1[1])
    p['vec64'] = v64

    # temporal L2 weight + combiner bottom rows, packed with aligned row slices
    tail_w = jnp.zeros((TAILW_ROWS, H), jnp.float32)
    tail_w = tail_w.at[0:H // 4, :H // 2].set(te_w2)
    tail_w = tail_w.at[H // 4:H // 4 + H // 2, :].set(cb_w[D2:])
    p['tail_w'] = tail_w
    return p


# =======================================================================
if __name__ == "__main__":
    root = jax.random.PRNGKey(0)
    k_param, k_items, k_days, k_since = jax.random.split(root, 4)

    params = make_params(k_param)

    # synthetic ragged inputs, regularized to static shapes
    order_history = jax.random.randint(k_items, (B, N, L), 1, V, dtype=jnp.int32)
    days_between = jax.random.uniform(k_days, (B, N), jnp.float32, 1.0, 30.0)
    days_since_last = jax.random.uniform(k_since, (B,), jnp.float32, 0.0, 15.0)

    fwd = jax.jit(next_basket_predictor_forward)
    item_probs, value = fwd(params, order_history, days_between, days_since_last)
    jax.block_until_ready((item_probs, value))

    assert item_probs.shape == (B, V) and value.shape == (B, 1)
    assert bool(jnp.all(jnp.isfinite(item_probs))) and bool(jnp.all(jnp.isfinite(value)))
    # softmax rows sum to ~1 (exact division in-kernel; bf16 weights only
    # perturb the logits, not the normalization)
    assert bool(jnp.allclose(item_probs.sum(axis=-1), 1.0, atol=1e-3))

    # equivalent of .act(): top-k basket (glue, not part of forward)
    _top_vals, _top_items = jax.lax.top_k(item_probs, BASKET)
    jax.block_until_ready(_top_items)

    print("KERNEL_OK")
</pallas_src>

<mosaic_0001>
module attributes {stable_mosaic.version = 11 : i64} {
  func.func @_heads_kernel(%arg0: memref<4x128xf32, #tpu.memory_space<vmem>>, %arg1: memref<4x2xf32, #tpu.memory_space<vmem>>, %arg2: memref<64x192xbf16, #tpu.memory_space<vmem>>, %arg3: memref<4x128x128xbf16, #tpu.memory_space<vmem>>, %arg4: memref<128x512xbf16, #tpu.memory_space<vmem>>, %arg5: memref<2x64x64xbf16, #tpu.memory_space<vmem>>, %arg6: memref<12x128xf32, #tpu.memory_space<vmem>>, %arg7: memref<1x512xf32, #tpu.memory_space<vmem>>, %arg8: memref<22x64xf32, #tpu.memory_space<vmem>>, %arg9: memref<48x64xf32, #tpu.memory_space<vmem>>, %arg10: memref<4x512xf32, #tpu.memory_space<vmem>>, %arg11: memref<4x128xf32, #tpu.memory_space<vmem>>) attributes {dimension_semantics = [], scalar_prefetch = 0 : i64, scratch_operands = 0 : i64, tpu.core_type = #tpu.core_type<tc>} {
    %c0 = arith.constant 0 : index
    %c0_0 = arith.constant 0 : index
    %0 = vector.load %arg0[%c0, %c0_0] : memref<4x128xf32, #tpu.memory_space<vmem>>, vector<4x128xf32>
    %c0_1 = arith.constant 0 : index
    %c0_2 = arith.constant 0 : index
    %1 = vector.load %arg1[%c0_1, %c0_2] : memref<4x2xf32, #tpu.memory_space<vmem>>, vector<4x2xf32>
    %c0_3 = arith.constant 0 : index
    %c0_4 = arith.constant 0 : index
    %2 = vector.load %arg6[%c0_3, %c0_4] : memref<12x128xf32, #tpu.memory_space<vmem>>, vector<12x128xf32>
    %c0_5 = arith.constant 0 : index
    %c0_6 = arith.constant 0 : index
    %3 = vector.load %arg8[%c0_5, %c0_6] : memref<22x64xf32, #tpu.memory_space<vmem>>, vector<22x64xf32>
    %4 = vector.extract_strided_slice %1 {offsets = [0, 0], sizes = [4, 1], strides = [1, 1]} : vector<4x2xf32> to vector<4x1xf32>
    %5 = vector.extract_strided_slice %3 {offsets = [11, 0], sizes = [1, 64], strides = [1, 1]} : vector<22x64xf32> to vector<1x64xf32>
    %6 = vector.extract_strided_slice %5 {offsets = [0, 0], sizes = [1, 16], strides = [1, 1]} : vector<1x64xf32> to vector<1x16xf32>
    %7 = vector.broadcast %4 : vector<4x1xf32> to vector<4x16xf32>
    %8 = vector.broadcast %6 : vector<1x16xf32> to vector<4x16xf32>
    %9 = arith.mulf %7, %8 : vector<4x16xf32>
    %10 = vector.extract_strided_slice %1 {offsets = [0, 1], sizes = [4, 1], strides = [1, 1]} : vector<4x2xf32> to vector<4x1xf32>
    %11 = vector.extract_strided_slice %3 {offsets = [12, 0], sizes = [1, 64], strides = [1, 1]} : vector<22x64xf32> to vector<1x64xf32>
    %12 = vector.extract_strided_slice %11 {offsets = [0, 0], sizes = [1, 16], strides = [1, 1]} : vector<1x64xf32> to vector<1x16xf32>
    %13 = vector.broadcast %10 : vector<4x1xf32> to vector<4x16xf32>
    %14 = vector.broadcast %12 : vector<1x16xf32> to vector<4x16xf32>
    %15 = arith.mulf %13, %14 : vector<4x16xf32>
    %16 = arith.addf %9, %15 : vector<4x16xf32>
    %17 = vector.extract_strided_slice %3 {offsets = [13, 0], sizes = [1, 64], strides = [1, 1]} : vector<22x64xf32> to vector<1x64xf32>
    %18 = vector.extract_strided_slice %17 {offsets = [0, 0], sizes = [1, 16], strides = [1, 1]} : vector<1x64xf32> to vector<1x16xf32>
    %19 = vector.broadcast %18 : vector<1x16xf32> to vector<4x16xf32>
    %20 = arith.addf %16, %19 : vector<4x16xf32>
    %21 = vector.extract_strided_slice %3 {offsets = [14, 0], sizes = [1, 64], strides = [1, 1]} : vector<22x64xf32> to vector<1x64xf32>
    %22 = vector.extract_strided_slice %21 {offsets = [0, 0], sizes = [1, 16], strides = [1, 1]} : vector<1x64xf32> to vector<1x16xf32>
    %23 = vector.extract_strided_slice %3 {offsets = [15, 0], sizes = [1, 64], strides = [1, 1]} : vector<22x64xf32> to vector<1x64xf32>
    %24 = vector.extract_strided_slice %23 {offsets = [0, 0], sizes = [1, 16], strides = [1, 1]} : vector<1x64xf32> to vector<1x16xf32>
    %cst = arith.constant dense<0.000000e+00> : vector<4xf32>
    %25 = vector.multi_reduction <add>, %20, %cst [1] : vector<4x16xf32> to vector<4xf32>
    %26 = vector.shape_cast %25 : vector<4xf32> to vector<4x1xf32>
    %cst_7 = arith.constant 1.600000e+01 : f32
    %27 = vector.broadcast %cst_7 : f32 to vector<4x1xf32>
    %28 = arith.divf %26, %27 : vector<4x1xf32>
    %29 = vector.broadcast %28 : vector<4x1xf32> to vector<4x16xf32>
    %30 = arith.subf %20, %29 : vector<4x16xf32>
    %31 = arith.mulf %30, %30 : vector<4x16xf32>
    %cst_8 = arith.constant dense<0.000000e+00> : vector<4xf32>
    %32 = vector.multi_reduction <add>, %31, %cst_8 [1] : vector<4x16xf32> to vector<4xf32>
    %33 = vector.shape_cast %32 : vector<4xf32> to vector<4x1xf32>
    %cst_9 = arith.constant 1.600000e+01 : f32
    %34 = vector.broadcast %cst_9 : f32 to vector<4x1xf32>
    %35 = arith.divf %33, %34 : vector<4x1xf32>
    %36 = vector.broadcast %28 : vector<4x1xf32> to vector<4x16xf32>
    %37 = arith.subf %20, %36 : vector<4x16xf32>
    %cst_10 = arith.constant 9.99999974E-6 : f32
    %38 = vector.broadcast %cst_10 : f32 to vector<4x1xf32>
    %39 = arith.addf %35, %38 : vector<4x1xf32>
    %40 = math.rsqrt %39 : vector<4x1xf32>
    %41 = vector.broadcast %40 : vector<4x1xf32> to vector<4x16xf32>
    %42 = arith.mulf %37, %41 : vector<4x16xf32>
    %43 = vector.broadcast %22 : vector<1x16xf32> to vector<4x16xf32>
    %44 = arith.mulf %42, %43 : vector<4x16xf32>
    %45 = vector.broadcast %24 : vector<1x16xf32> to vector<4x16xf32>
    %46 = arith.addf %44, %45 : vector<4x16xf32>
    %cst_11 = arith.constant 0.000000e+00 : f32
    %47 = vector.broadcast %cst_11 : f32 to vector<4x16xf32>
    %48 = arith.maximumf %46, %47 : vector<4x16xf32>
    %c0_12 = arith.constant 0 : index
    %c0_13 = arith.constant 0 : index
    %49 = vector.load %arg9[%c0_12, %c0_13] : memref<48x64xf32, #tpu.memory_space<vmem>>, vector<16x32xf32>
    %cst_14 = arith.constant dense<0.000000e+00> : vector<4x32xf32>
    %50 = tpu.matmul %48, %49, %cst_14 {dimension_numbers = #tpu.dot_dimension_numbers<[1], [0], [0], [1], [0, 0, 1, 1], [], []>} : vector<4x16xf32>, vector<16x32xf32>, vector<4x32xf32> -> vector<4x32xf32>
    %51 = vector.extract_strided_slice %3 {offsets = [16, 0], sizes = [1, 64], strides = [1, 1]} : vector<22x64xf32> to vector<1x64xf32>
    %52 = vector.extract_strided_slice %51 {offsets = [0, 0], sizes = [1, 32], strides = [1, 1]} : vector<1x64xf32> to vector<1x32xf32>
    %53 = vector.broadcast %52 : vector<1x32xf32> to vector<4x32xf32>
    %54 = arith.addf %50, %53 : vector<4x32xf32>
    %55 = vector.extract_strided_slice %3 {offsets = [17, 0], sizes = [1, 64], strides = [1, 1]} : vector<22x64xf32> to vector<1x64xf32>
    %56 = vector.extract_strided_slice %55 {offsets = [0, 0], sizes = [1, 32], strides = [1, 1]} : vector<1x64xf32> to vector<1x32xf32>
    %57 = vector.extract_strided_slice %3 {offsets = [18, 0], sizes = [1, 64], strides = [1, 1]} : vector<22x64xf32> to vector<1x64xf32>
    %58 = vector.extract_strided_slice %57 {offsets = [0, 0], sizes = [1, 32], strides = [1, 1]} : vector<1x64xf32> to vector<1x32xf32>
    %cst_15 = arith.constant dense<0.000000e+00> : vector<4xf32>
    %59 = vector.multi_reduction <add>, %54, %cst_15 [1] : vector<4x32xf32> to vector<4xf32>
    %60 = vector.shape_cast %59 : vector<4xf32> to vector<4x1xf32>
    %cst_16 = arith.constant 3.200000e+01 : f32
    %61 = vector.broadcast %cst_16 : f32 to vector<4x1xf32>
    %62 = arith.divf %60, %61 : vector<4x1xf32>
    %63 = vector.broadcast %62 : vector<4x1xf32> to vector<4x32xf32>
    %64 = arith.subf %54, %63 : vector<4x32xf32>
    %65 = arith.mulf %64, %64 : vector<4x32xf32>
    %cst_17 = arith.constant dense<0.000000e+00> : vector<4xf32>
    %66 = vector.multi_reduction <add>, %65, %cst_17 [1] : vector<4x32xf32> to vector<4xf32>
    %67 = vector.shape_cast %66 : vector<4xf32> to vector<4x1xf32>
    %cst_18 = arith.constant 3.200000e+01 : f32
    %68 = vector.broadcast %cst_18 : f32 to vector<4x1xf32>
    %69 = arith.divf %67, %68 : vector<4x1xf32>
    %70 = vector.broadcast %62 : vector<4x1xf32> to vector<4x32xf32>
    %71 = arith.subf %54, %70 : vector<4x32xf32>
    %cst_19 = arith.constant 9.99999974E-6 : f32
    %72 = vector.broadcast %cst_19 : f32 to vector<4x1xf32>
    %73 = arith.addf %69, %72 : vector<4x1xf32>
    %74 = math.rsqrt %73 : vector<4x1xf32>
    %75 = vector.broadcast %74 : vector<4x1xf32> to vector<4x32xf32>
    %76 = arith.mulf %71, %75 : vector<4x32xf32>
    %77 = vector.broadcast %56 : vector<1x32xf32> to vector<4x32xf32>
    %78 = arith.mulf %76, %77 : vector<4x32xf32>
    %79 = vector.broadcast %58 : vector<1x32xf32> to vector<4x32xf32>
    %80 = arith.addf %78, %79 : vector<4x32xf32>
    %cst_20 = arith.constant 0.000000e+00 : f32
    %81 = vector.broadcast %cst_20 : f32 to vector<4x32xf32>
    %82 = arith.maximumf %80, %81 : vector<4x32xf32>
    %c3 = arith.constant 3 : index
    %c0_21 = arith.constant 0 : index
    %c0_22 = arith.constant 0 : index
    %83 = vector.load %arg3[%c3, %c0_21, %c0_22] : memref<4x128x128xbf16, #tpu.memory_space<vmem>>, vector<1x128x128xbf16>
    %84 = vector.shape_cast %83 : vector<1x128x128xbf16> to vector<128x128xbf16>
    %85 = arith.truncf %0 : vector<4x128xf32> to vector<4x128xbf16>
    %cst_23 = arith.constant dense<0.000000e+00> : vector<4x128xf32>
    %86 = tpu.matmul %85, %84, %cst_23 {dimension_numbers = #tpu.dot_dimension_numbers<[1], [0], [0], [1], [0, 0, 1, 1], [], []>} : vector<4x128xbf16>, vector<128x128xbf16>, vector<4x128xf32> -> vector<4x128xf32>
    %87 = vector.extract_strided_slice %86 {offsets = [0, 0], sizes = [4, 64], strides = [1, 1]} : vector<4x128xf32> to vector<4x64xf32>
    %c16 = arith.constant 16 : index
    %c0_24 = arith.constant 0 : index
    %88 = vector.load %arg9[%c16, %c0_24] : memref<48x64xf32, #tpu.memory_space<vmem>>, vector<32x64xf32>
    %cst_25 = arith.constant dense<0.000000e+00> : vector<4x64xf32>
    %89 = tpu.matmul %82, %88, %cst_25 {dimension_numbers = #tpu.dot_dimension_numbers<[1], [0], [0], [1], [0, 0, 1, 1], [], []>} : vector<4x32xf32>, vector<32x64xf32>, vector<4x64xf32> -> vector<4x64xf32>
    %90 = arith.addf %87, %89 : vector<4x64xf32>
    %91 = vector.extract_strided_slice %3 {offsets = [19, 0], sizes = [1, 64], strides = [1, 1]} : vector<22x64xf32> to vector<1x64xf32>
    %92 = vector.broadcast %91 : vector<1x64xf32> to vector<4x64xf32>
    %93 = arith.addf %90, %92 : vector<4x64xf32>
    %94 = vector.extract_strided_slice %3 {offsets = [20, 0], sizes = [1, 64], strides = [1, 1]} : vector<22x64xf32> to vector<1x64xf32>
    %95 = vector.extract_strided_slice %3 {offsets = [21, 0], sizes = [1, 64], strides = [1, 1]} : vector<22x64xf32> to vector<1x64xf32>
    %cst_26 = arith.constant dense<0.000000e+00> : vector<4xf32>
    %96 = vector.multi_reduction <add>, %93, %cst_26 [1] : vector<4x64xf32> to vector<4xf32>
    %97 = vector.shape_cast %96 : vector<4xf32> to vector<4x1xf32>
    %cst_27 = arith.constant 6.400000e+01 : f32
    %98 = vector.broadcast %cst_27 : f32 to vector<4x1xf32>
    %99 = arith.divf %97, %98 : vector<4x1xf32>
    %100 = vector.broadcast %99 : vector<4x1xf32> to vector<4x64xf32>
    %101 = arith.subf %93, %100 : vector<4x64xf32>
    %102 = arith.mulf %101, %101 : vector<4x64xf32>
    %cst_28 = arith.constant dense<0.000000e+00> : vector<4xf32>
    %103 = vector.multi_reduction <add>, %102, %cst_28 [1] : vector<4x64xf32> to vector<4xf32>
    %104 = vector.shape_cast %103 : vector<4xf32> to vector<4x1xf32>
    %cst_29 = arith.constant 6.400000e+01 : f32
    %105 = vector.broadcast %cst_29 : f32 to vector<4x1xf32>
    %106 = arith.divf %104, %105 : vector<4x1xf32>
    %107 = vector.broadcast %99 : vector<4x1xf32> to vector<4x64xf32>
    %108 = arith.subf %93, %107 : vector<4x64xf32>
    %cst_30 = arith.constant 9.99999974E-6 : f32
    %109 = vector.broadcast %cst_30 : f32 to vector<4x1xf32>
    %110 = arith.addf %106, %109 : vector<4x1xf32>
    %111 = math.rsqrt %110 : vector<4x1xf32>
    %112 = vector.broadcast %111 : vector<4x1xf32> to vector<4x64xf32>
    %113 = arith.mulf %108, %112 : vector<4x64xf32>
    %114 = vector.broadcast %94 : vector<1x64xf32> to vector<4x64xf32>
    %115 = arith.mulf %113, %114 : vector<4x64xf32>
    %116 = vector.broadcast %95 : vector<1x64xf32> to vector<4x64xf32>
    %117 = arith.addf %115, %116 : vector<4x64xf32>
    %cst_31 = arith.constant 0.000000e+00 : f32
    %118 = vector.broadcast %cst_31 : f32 to vector<4x64xf32>
    %119 = arith.maximumf %117, %118 : vector<4x64xf32>
    %c0_32 = arith.constant 0 : index
    %c0_33 = arith.constant 0 : index
    %120 = vector.load %arg2[%c0_32, %c0_33] : memref<64x192xbf16, #tpu.memory_space<vmem>>, vector<64x192xbf16>
    %121 = arith.truncf %119 : vector<4x64xf32> to vector<4x64xbf16>
    %cst_34 = arith.constant dense<0.000000e+00> : vector<4x192xf32>
    %122 = tpu.matmul %121, %120, %cst_34 {dimension_numbers = #tpu.dot_dimension_numbers<[1], [0], [0], [1], [0, 0, 1, 1], [], []>} : vector<4x64xbf16>, vector<64x192xbf16>, vector<4x192xf32> -> vector<4x192xf32>
    %123 = vector.extract_strided_slice %122 {offsets = [0, 0], sizes = [4, 128], strides = [1, 1]} : vector<4x192xf32> to vector<4x128xf32>
    %124 = vector.extract_strided_slice %2 {offsets = [0, 0], sizes = [1, 128], strides = [1, 1]} : vector<12x128xf32> to vector<1x128xf32>
    %125 = vector.broadcast %124 : vector<1x128xf32> to vector<4x128xf32>
    %126 = arith.addf %123, %125 : vector<4x128xf32>
    %127 = vector.extract_strided_slice %2 {offsets = [1, 0], sizes = [1, 128], strides = [1, 1]} : vector<12x128xf32> to vector<1x128xf32>
    %128 = vector.extract_strided_slice %2 {offsets = [2, 0], sizes = [1, 128], strides = [1, 1]} : vector<12x128xf32> to vector<1x128xf32>
    %cst_35 = arith.constant dense<0.000000e+00> : vector<4xf32>
    %129 = vector.multi_reduction <add>, %126, %cst_35 [1] : vector<4x128xf32> to vector<4xf32>
    %130 = vector.shape_cast %129 : vector<4xf32> to vector<4x1xf32>
    %cst_36 = arith.constant 1.280000e+02 : f32
    %131 = vector.broadcast %cst_36 : f32 to vector<4x1xf32>
    %132 = arith.divf %130, %131 : vector<4x1xf32>
    %133 = vector.broadcast %132 : vector<4x1xf32> to vector<4x128xf32>
    %134 = arith.subf %126, %133 : vector<4x128xf32>
    %135 = arith.mulf %134, %134 : vector<4x128xf32>
    %cst_37 = arith.constant dense<0.000000e+00> : vector<4xf32>
    %136 = vector.multi_reduction <add>, %135, %cst_37 [1] : vector<4x128xf32> to vector<4xf32>
    %137 = vector.shape_cast %136 : vector<4xf32> to vector<4x1xf32>
    %cst_38 = arith.constant 1.280000e+02 : f32
    %138 = vector.broadcast %cst_38 : f32 to vector<4x1xf32>
    %139 = arith.divf %137, %138 : vector<4x1xf32>
    %140 = vector.broadcast %132 : vector<4x1xf32> to vector<4x128xf32>
    %141 = arith.subf %126, %140 : vector<4x128xf32>
    %cst_39 = arith.constant 9.99999974E-6 : f32
    %142 = vector.broadcast %cst_39 : f32 to vector<4x1xf32>
    %143 = arith.addf %139, %142 : vector<4x1xf32>
    %144 = math.rsqrt %143 : vector<4x1xf32>
    %145 = vector.broadcast %144 : vector<4x1xf32> to vector<4x128xf32>
    %146 = arith.mulf %141, %145 : vector<4x128xf32>
    %147 = vector.broadcast %127 : vector<1x128xf32> to vector<4x128xf32>
    %148 = arith.mulf %146, %147 : vector<4x128xf32>
    %149 = vector.broadcast %128 : vector<1x128xf32> to vector<4x128xf32>
    %150 = arith.addf %148, %149 : vector<4x128xf32>
    %cst_40 = arith.constant 0.000000e+00 : f32
    %151 = vector.broadcast %cst_40 : f32 to vector<4x128xf32>
    %152 = arith.maximumf %150, %151 : vector<4x128xf32>
    %c0_41 = arith.constant 0 : index
    %c0_42 = arith.constant 0 : index
    %c0_43 = arith.constant 0 : index
    %153 = vector.load %arg3[%c0_41, %c0_42, %c0_43] : memref<4x128x128xbf16, #tpu.memory_space<vmem>>, vector<1x128x128xbf16>
    %154 = vector.shape_cast %153 : vector<1x128x128xbf16> to vector<128x128xbf16>
    %155 = arith.truncf %152 : vector<4x128xf32> to vector<4x128xbf16>
    %cst_44 = arith.constant dense<0.000000e+00> : vector<4x128xf32>
    %156 = tpu.matmul %155, %154, %cst_44 {dimension_numbers = #tpu.dot_dimension_numbers<[1], [0], [0], [1], [0, 0, 1, 1], [], []>} : vector<4x128xbf16>, vector<128x128xbf16>, vector<4x128xf32> -> vector<4x128xf32>
    %157 = vector.extract_strided_slice %2 {offsets = [3, 0], sizes = [1, 128], strides = [1, 1]} : vector<12x128xf32> to vector<1x128xf32>
    %158 = vector.broadcast %157 : vector<1x128xf32> to vector<4x128xf32>
    %159 = arith.addf %156, %158 : vector<4x128xf32>
    %160 = vector.extract_strided_slice %2 {offsets = [4, 0], sizes = [1, 128], strides = [1, 1]} : vector<12x128xf32> to vector<1x128xf32>
    %161 = vector.extract_strided_slice %2 {offsets = [5, 0], sizes = [1, 128], strides = [1, 1]} : vector<12x128xf32> to vector<1x128xf32>
    %cst_45 = arith.constant dense<0.000000e+00> : vector<4xf32>
    %162 = vector.multi_reduction <add>, %159, %cst_45 [1] : vector<4x128xf32> to vector<4xf32>
    %163 = vector.shape_cast %162 : vector<4xf32> to vector<4x1xf32>
    %cst_46 = arith.constant 1.280000e+02 : f32
    %164 = vector.broadcast %cst_46 : f32 to vector<4x1xf32>
    %165 = arith.divf %163, %164 : vector<4x1xf32>
    %166 = vector.broadcast %165 : vector<4x1xf32> to vector<4x128xf32>
    %167 = arith.subf %159, %166 : vector<4x128xf32>
    %168 = arith.mulf %167, %167 : vector<4x128xf32>
    %cst_47 = arith.constant dense<0.000000e+00> : vector<4xf32>
    %169 = vector.multi_reduction <add>, %168, %cst_47 [1] : vector<4x128xf32> to vector<4xf32>
    %170 = vector.shape_cast %169 : vector<4xf32> to vector<4x1xf32>
    %cst_48 = arith.constant 1.280000e+02 : f32
    %171 = vector.broadcast %cst_48 : f32 to vector<4x1xf32>
    %172 = arith.divf %170, %171 : vector<4x1xf32>
    %173 = vector.broadcast %165 : vector<4x1xf32> to vector<4x128xf32>
    %174 = arith.subf %159, %173 : vector<4x128xf32>
    %cst_49 = arith.constant 9.99999974E-6 : f32
    %175 = vector.broadcast %cst_49 : f32 to vector<4x1xf32>
    %176 = arith.addf %172, %175 : vector<4x1xf32>
    %177 = math.rsqrt %176 : vector<4x1xf32>
    %178 = vector.broadcast %177 : vector<4x1xf32> to vector<4x128xf32>
    %179 = arith.mulf %174, %178 : vector<4x128xf32>
    %180 = vector.broadcast %160 : vector<1x128xf32> to vector<4x128xf32>
    %181 = arith.mulf %179, %180 : vector<4x128xf32>
    %182 = vector.broadcast %161 : vector<1x128xf32> to vector<4x128xf32>
    %183 = arith.addf %181, %182 : vector<4x128xf32>
    %cst_50 = arith.constant 0.000000e+00 : f32
    %184 = vector.broadcast %cst_50 : f32 to vector<4x128xf32>
    %185 = arith.maximumf %183, %184 : vector<4x128xf32>
    %c1 = arith.constant 1 : index
    %c0_51 = arith.constant 0 : index
    %c0_52 = arith.constant 0 : index
    %186 = vector.load %arg3[%c1, %c0_51, %c0_52] : memref<4x128x128xbf16, #tpu.memory_space<vmem>>, vector<1x128x128xbf16>
    %187 = vector.shape_cast %186 : vector<1x128x128xbf16> to vector<128x128xbf16>
    %188 = arith.truncf %185 : vector<4x128xf32> to vector<4x128xbf16>
    %cst_53 = arith.constant dense<0.000000e+00> : vector<4x128xf32>
    %189 = tpu.matmul %188, %187, %cst_53 {dimension_numbers = #tpu.dot_dimension_numbers<[1], [0], [0], [1], [0, 0, 1, 1], [], []>} : vector<4x128xbf16>, vector<128x128xbf16>, vector<4x128xf32> -> vector<4x128xf32>
    %190 = vector.extract_strided_slice %2 {offsets = [6, 0], sizes = [1, 128], strides = [1, 1]} : vector<12x128xf32> to vector<1x128xf32>
    %191 = vector.broadcast %190 : vector<1x128xf32> to vector<4x128xf32>
    %192 = arith.addf %189, %191 : vector<4x128xf32>
    %193 = vector.extract_strided_slice %2 {offsets = [7, 0], sizes = [1, 128], strides = [1, 1]} : vector<12x128xf32> to vector<1x128xf32>
    %194 = vector.extract_strided_slice %2 {offsets = [8, 0], sizes = [1, 128], strides = [1, 1]} : vector<12x128xf32> to vector<1x128xf32>
    %cst_54 = arith.constant dense<0.000000e+00> : vector<4xf32>
    %195 = vector.multi_reduction <add>, %192, %cst_54 [1] : vector<4x128xf32> to vector<4xf32>
    %196 = vector.shape_cast %195 : vector<4xf32> to vector<4x1xf32>
    %cst_55 = arith.constant 1.280000e+02 : f32
    %197 = vector.broadcast %cst_55 : f32 to vector<4x1xf32>
    %198 = arith.divf %196, %197 : vector<4x1xf32>
    %199 = vector.broadcast %198 : vector<4x1xf32> to vector<4x128xf32>
    %200 = arith.subf %192, %199 : vector<4x128xf32>
    %201 = arith.mulf %200, %200 : vector<4x128xf32>
    %cst_56 = arith.constant dense<0.000000e+00> : vector<4xf32>
    %202 = vector.multi_reduction <add>, %201, %cst_56 [1] : vector<4x128xf32> to vector<4xf32>
    %203 = vector.shape_cast %202 : vector<4xf32> to vector<4x1xf32>
    %cst_57 = arith.constant 1.280000e+02 : f32
    %204 = vector.broadcast %cst_57 : f32 to vector<4x1xf32>
    %205 = arith.divf %203, %204 : vector<4x1xf32>
    %206 = vector.broadcast %198 : vector<4x1xf32> to vector<4x128xf32>
    %207 = arith.subf %192, %206 : vector<4x128xf32>
    %cst_58 = arith.constant 9.99999974E-6 : f32
    %208 = vector.broadcast %cst_58 : f32 to vector<4x1xf32>
    %209 = arith.addf %205, %208 : vector<4x1xf32>
    %210 = math.rsqrt %209 : vector<4x1xf32>
    %211 = vector.broadcast %210 : vector<4x1xf32> to vector<4x128xf32>
    %212 = arith.mulf %207, %211 : vector<4x128xf32>
    %213 = vector.broadcast %193 : vector<1x128xf32> to vector<4x128xf32>
    %214 = arith.mulf %212, %213 : vector<4x128xf32>
    %215 = vector.broadcast %194 : vector<1x128xf32> to vector<4x128xf32>
    %216 = arith.addf %214, %215 : vector<4x128xf32>
    %217 = arith.addf %152, %216 : vector<4x128xf32>
    %c2 = arith.constant 2 : index
    %c0_59 = arith.constant 0 : index
    %c0_60 = arith.constant 0 : index
    %218 = vector.load %arg3[%c2, %c0_59, %c0_60] : memref<4x128x128xbf16, #tpu.memory_space<vmem>>, vector<1x128x128xbf16>
    %219 = vector.shape_cast %218 : vector<1x128x128xbf16> to vector<128x128xbf16>
    %220 = arith.truncf %217 : vector<4x128xf32> to vector<4x128xbf16>
    %cst_61 = arith.constant dense<0.000000e+00> : vector<4x128xf32>
    %221 = tpu.matmul %220, %219, %cst_61 {dimension_numbers = #tpu.dot_dimension_numbers<[1], [0], [0], [1], [0, 0, 1, 1], [], []>} : vector<4x128xbf16>, vector<128x128xbf16>, vector<4x128xf32> -> vector<4x128xf32>
    %222 = vector.extract_strided_slice %2 {offsets = [9, 0], sizes = [1, 128], strides = [1, 1]} : vector<12x128xf32> to vector<1x128xf32>
    %223 = vector.broadcast %222 : vector<1x128xf32> to vector<4x128xf32>
    %224 = arith.addf %221, %223 : vector<4x128xf32>
    %225 = vector.extract_strided_slice %2 {offsets = [10, 0], sizes = [1, 128], strides = [1, 1]} : vector<12x128xf32> to vector<1x128xf32>
    %226 = vector.extract_strided_slice %2 {offsets = [11, 0], sizes = [1, 128], strides = [1, 1]} : vector<12x128xf32> to vector<1x128xf32>
    %cst_62 = arith.constant dense<0.000000e+00> : vector<4xf32>
    %227 = vector.multi_reduction <add>, %224, %cst_62 [1] : vector<4x128xf32> to vector<4xf32>
    %228 = vector.shape_cast %227 : vector<4xf32> to vector<4x1xf32>
    %cst_63 = arith.constant 1.280000e+02 : f32
    %229 = vector.broadcast %cst_63 : f32 to vector<4x1xf32>
    %230 = arith.divf %228, %229 : vector<4x1xf32>
    %231 = vector.broadcast %230 : vector<4x1xf32> to vector<4x128xf32>
    %232 = arith.subf %224, %231 : vector<4x128xf32>
    %233 = arith.mulf %232, %232 : vector<4x128xf32>
    %cst_64 = arith.constant dense<0.000000e+00> : vector<4xf32>
    %234 = vector.multi_reduction <add>, %233, %cst_64 [1] : vector<4x128xf32> to vector<4xf32>
    %235 = vector.shape_cast %234 : vector<4xf32> to vector<4x1xf32>
    %cst_65 = arith.constant 1.280000e+02 : f32
    %236 = vector.broadcast %cst_65 : f32 to vector<4x1xf32>
    %237 = arith.divf %235, %236 : vector<4x1xf32>
    %238 = vector.broadcast %230 : vector<4x1xf32> to vector<4x128xf32>
    %239 = arith.subf %224, %238 : vector<4x128xf32>
    %cst_66 = arith.constant 9.99999974E-6 : f32
    %240 = vector.broadcast %cst_66 : f32 to vector<4x1xf32>
    %241 = arith.addf %237, %240 : vector<4x1xf32>
    %242 = math.rsqrt %241 : vector<4x1xf32>
    %243 = vector.broadcast %242 : vector<4x1xf32> to vector<4x128xf32>
    %244 = arith.mulf %239, %243 : vector<4x128xf32>
    %245 = vector.broadcast %225 : vector<1x128xf32> to vector<4x128xf32>
    %246 = arith.mulf %244, %245 : vector<4x128xf32>
    %247 = vector.broadcast %226 : vector<1x128xf32> to vector<4x128xf32>
    %248 = arith.addf %246, %247 : vector<4x128xf32>
    %cst_67 = arith.constant 0.000000e+00 : f32
    %249 = vector.broadcast %cst_67 : f32 to vector<4x128xf32>
    %250 = arith.maximumf %248, %249 : vector<4x128xf32>
    %c0_68 = arith.constant 0 : index
    %c0_69 = arith.constant 0 : index
    %251 = vector.load %arg4[%c0_68, %c0_69] : memref<128x512xbf16, #tpu.memory_space<vmem>>, vector<128x512xbf16>
    %252 = arith.truncf %250 : vector<4x128xf32> to vector<4x128xbf16>
    %cst_70 = arith.constant dense<0.000000e+00> : vector<4x512xf32>
    %253 = tpu.matmul %252, %251, %cst_70 {dimension_numbers = #tpu.dot_dimension_numbers<[1], [0], [0], [1], [0, 0, 1, 1], [], []>} : vector<4x128xbf16>, vector<128x512xbf16>, vector<4x512xf32> -> vector<4x512xf32>
    %c0_71 = arith.constant 0 : index
    %c0_72 = arith.constant 0 : index
    %254 = vector.load %arg7[%c0_71, %c0_72] : memref<1x512xf32, #tpu.memory_space<vmem>>, vector<1x512xf32>
    %255 = vector.broadcast %254 : vector<1x512xf32> to vector<4x512xf32>
    %256 = arith.addf %253, %255 : vector<4x512xf32>
    %cst_73 = arith.constant dense<0xFF800000> : vector<4xf32>
    %257 = vector.multi_reduction <maximumf>, %256, %cst_73 [1] : vector<4x512xf32> to vector<4xf32>
    %258 = vector.shape_cast %257 : vector<4xf32> to vector<4x1xf32>
    %259 = vector.broadcast %258 : vector<4x1xf32> to vector<4x512xf32>
    %260 = arith.subf %256, %259 : vector<4x512xf32>
    %261 = math.exp %260 : vector<4x512xf32>
    %cst_74 = arith.constant dense<0.000000e+00> : vector<4xf32>
    %262 = vector.multi_reduction <add>, %261, %cst_74 [1] : vector<4x512xf32> to vector<4xf32>
    %263 = vector.shape_cast %262 : vector<4xf32> to vector<4x1xf32>
    %264 = vector.broadcast %263 : vector<4x1xf32> to vector<4x512xf32>
    %265 = arith.divf %261, %264 : vector<4x512xf32>
    %c0_75 = arith.constant 0 : index
    %c0_76 = arith.constant 0 : index
    %266 = vector.load %arg10[%c0_75, %c0_76] : memref<4x512xf32, #tpu.memory_space<vmem>>, vector<4x512xf32>
    tpu.vector_store %arg10[%c0_75, %c0_76], %265 {strides = array<i32>} : memref<4x512xf32, #tpu.memory_space<vmem>>, vector<4x512xf32>,
    %267 = vector.extract_strided_slice %122 {offsets = [0, 128], sizes = [4, 64], strides = [1, 1]} : vector<4x192xf32> to vector<4x64xf32>
    %268 = vector.extract_strided_slice %3 {offsets = [0, 0], sizes = [1, 64], strides = [1, 1]} : vector<22x64xf32> to vector<1x64xf32>
    %269 = vector.broadcast %268 : vector<1x64xf32> to vector<4x64xf32>
    %270 = arith.addf %267, %269 : vector<4x64xf32>
    %271 = vector.extract_strided_slice %3 {offsets = [1, 0], sizes = [1, 64], strides = [1, 1]} : vector<22x64xf32> to vector<1x64xf32>
    %272 = vector.extract_strided_slice %3 {offsets = [2, 0], sizes = [1, 64], strides = [1, 1]} : vector<22x64xf32> to vector<1x64xf32>
    %cst_77 = arith.constant dense<0.000000e+00> : vector<4xf32>
    %273 = vector.multi_reduction <add>, %270, %cst_77 [1] : vector<4x64xf32> to vector<4xf32>
    %274 = vector.shape_cast %273 : vector<4xf32> to vector<4x1xf32>
    %cst_78 = arith.constant 6.400000e+01 : f32
    %275 = vector.broadcast %cst_78 : f32 to vector<4x1xf32>
    %276 = arith.divf %274, %275 : vector<4x1xf32>
    %277 = vector.broadcast %276 : vector<4x1xf32> to vector<4x64xf32>
    %278 = arith.subf %270, %277 : vector<4x64xf32>
    %279 = arith.mulf %278, %278 : vector<4x64xf32>
    %cst_79 = arith.constant dense<0.000000e+00> : vector<4xf32>
    %280 = vector.multi_reduction <add>, %279, %cst_79 [1] : vector<4x64xf32> to vector<4xf32>
    %281 = vector.shape_cast %280 : vector<4xf32> to vector<4x1xf32>
    %cst_80 = arith.constant 6.400000e+01 : f32
    %282 = vector.broadcast %cst_80 : f32 to vector<4x1xf32>
    %283 = arith.divf %281, %282 : vector<4x1xf32>
    %284 = vector.broadcast %276 : vector<4x1xf32> to vector<4x64xf32>
    %285 = arith.subf %270, %284 : vector<4x64xf32>
    %cst_81 = arith.constant 9.99999974E-6 : f32
    %286 = vector.broadcast %cst_81 : f32 to vector<4x1xf32>
    %287 = arith.addf %283, %286 : vector<4x1xf32>
    %288 = math.rsqrt %287 : vector<4x1xf32>
    %289 = vector.broadcast %288 : vector<4x1xf32> to vector<4x64xf32>
    %290 = arith.mulf %285, %289 : vector<4x64xf32>
    %291 = vector.broadcast %271 : vector<1x64xf32> to vector<4x64xf32>
    %292 = arith.mulf %290, %291 : vector<4x64xf32>
    %293 = vector.broadcast %272 : vector<1x64xf32> to vector<4x64xf32>
    %294 = arith.addf %292, %293 : vector<4x64xf32>
    %cst_82 = arith.constant 0.000000e+00 : f32
    %295 = vector.broadcast %cst_82 : f32 to vector<4x64xf32>
    %296 = arith.maximumf %294, %295 : vector<4x64xf32>
    %c0_83 = arith.constant 0 : index
    %c0_84 = arith.constant 0 : index
    %c0_85 = arith.constant 0 : index
    %297 = vector.load %arg5[%c0_83, %c0_84, %c0_85] : memref<2x64x64xbf16, #tpu.memory_space<vmem>>, vector<1x64x64xbf16>
    %298 = vector.shape_cast %297 : vector<1x64x64xbf16> to vector<64x64xbf16>
    %299 = arith.truncf %296 : vector<4x64xf32> to vector<4x64xbf16>
    %cst_86 = arith.constant dense<0.000000e+00> : vector<4x64xf32>
    %300 = tpu.matmul %299, %298, %cst_86 {dimension_numbers = #tpu.dot_dimension_numbers<[1], [0], [0], [1], [0, 0, 1, 1], [], []>} : vector<4x64xbf16>, vector<64x64xbf16>, vector<4x64xf32> -> vector<4x64xf32>
    %301 = vector.extract_strided_slice %3 {offsets = [3, 0], sizes = [1, 64], strides = [1, 1]} : vector<22x64xf32> to vector<1x64xf32>
    %302 = vector.broadcast %301 : vector<1x64xf32> to vector<4x64xf32>
    %303 = arith.addf %300, %302 : vector<4x64xf32>
    %304 = vector.extract_strided_slice %3 {offsets = [4, 0], sizes = [1, 64], strides = [1, 1]} : vector<22x64xf32> to vector<1x64xf32>
    %305 = vector.extract_strided_slice %3 {offsets = [5, 0], sizes = [1, 64], strides = [1, 1]} : vector<22x64xf32> to vector<1x64xf32>
    %cst_87 = arith.constant dense<0.000000e+00> : vector<4xf32>
    %306 = vector.multi_reduction <add>, %303, %cst_87 [1] : vector<4x64xf32> to vector<4xf32>
    %307 = vector.shape_cast %306 : vector<4xf32> to vector<4x1xf32>
    %cst_88 = arith.constant 6.400000e+01 : f32
    %308 = vector.broadcast %cst_88 : f32 to vector<4x1xf32>
    %309 = arith.divf %307, %308 : vector<4x1xf32>
    %310 = vector.broadcast %309 : vector<4x1xf32> to vector<4x64xf32>
    %311 = arith.subf %303, %310 : vector<4x64xf32>
    %312 = arith.mulf %311, %311 : vector<4x64xf32>
    %cst_89 = arith.constant dense<0.000000e+00> : vector<4xf32>
    %313 = vector.multi_reduction <add>, %312, %cst_89 [1] : vector<4x64xf32> to vector<4xf32>
    %314 = vector.shape_cast %313 : vector<4xf32> to vector<4x1xf32>
    %cst_90 = arith.constant 6.400000e+01 : f32
    %315 = vector.broadcast %cst_90 : f32 to vector<4x1xf32>
    %316 = arith.divf %314, %315 : vector<4x1xf32>
    %317 = vector.broadcast %309 : vector<4x1xf32> to vector<4x64xf32>
    %318 = arith.subf %303, %317 : vector<4x64xf32>
    %cst_91 = arith.constant 9.99999974E-6 : f32
    %319 = vector.broadcast %cst_91 : f32 to vector<4x1xf32>
    %320 = arith.addf %316, %319 : vector<4x1xf32>
    %321 = math.rsqrt %320 : vector<4x1xf32>
    %322 = vector.broadcast %321 : vector<4x1xf32> to vector<4x64xf32>
    %323 = arith.mulf %318, %322 : vector<4x64xf32>
    %324 = vector.broadcast %304 : vector<1x64xf32> to vector<4x64xf32>
    %325 = arith.mulf %323, %324 : vector<4x64xf32>
    %326 = vector.broadcast %305 : vector<1x64xf32> to vector<4x64xf32>
    %327 = arith.addf %325, %326 : vector<4x64xf32>
    %cst_92 = arith.constant 0.000000e+00 : f32
    %328 = vector.broadcast %cst_92 : f32 to vector<4x64xf32>
    %329 = arith.maximumf %327, %328 : vector<4x64xf32>
    %c1_93 = arith.constant 1 : index
    %c0_94 = arith.constant 0 : index
    %c0_95 = arith.constant 0 : index
    %330 = vector.load %arg5[%c1_93, %c0_94, %c0_95] : memref<2x64x64xbf16, #tpu.memory_space<vmem>>, vector<1x64x64xbf16>
    %331 = vector.shape_cast %330 : vector<1x64x64xbf16> to vector<64x64xbf16>
    %332 = arith.truncf %329 : vector<4x64xf32> to vector<4x64xbf16>
    %cst_96 = arith.constant dense<0.000000e+00> : vector<4x64xf32>
    %333 = tpu.matmul %332, %331, %cst_96 {dimension_numbers = #tpu.dot_dimension_numbers<[1], [0], [0], [1], [0, 0, 1, 1], [], []>} : vector<4x64xbf16>, vector<64x64xbf16>, vector<4x64xf32> -> vector<4x64xf32>
    %334 = vector.extract_strided_slice %3 {offsets = [6, 0], sizes = [1, 64], strides = [1, 1]} : vector<22x64xf32> to vector<1x64xf32>
    %335 = vector.broadcast %334 : vector<1x64xf32> to vector<4x64xf32>
    %336 = arith.addf %333, %335 : vector<4x64xf32>
    %337 = vector.extract_strided_slice %3 {offsets = [7, 0], sizes = [1, 64], strides = [1, 1]} : vector<22x64xf32> to vector<1x64xf32>
    %338 = vector.extract_strided_slice %3 {offsets = [8, 0], sizes = [1, 64], strides = [1, 1]} : vector<22x64xf32> to vector<1x64xf32>
    %cst_97 = arith.constant dense<0.000000e+00> : vector<4xf32>
    %339 = vector.multi_reduction <add>, %336, %cst_97 [1] : vector<4x64xf32> to vector<4xf32>
    %340 = vector.shape_cast %339 : vector<4xf32> to vector<4x1xf32>
    %cst_98 = arith.constant 6.400000e+01 : f32
    %341 = vector.broadcast %cst_98 : f32 to vector<4x1xf32>
    %342 = arith.divf %340, %341 : vector<4x1xf32>
    %343 = vector.broadcast %342 : vector<4x1xf32> to vector<4x64xf32>
    %344 = arith.subf %336, %343 : vector<4x64xf32>
    %345 = arith.mulf %344, %344 : vector<4x64xf32>
    %cst_99 = arith.constant dense<0.000000e+00> : vector<4xf32>
    %346 = vector.multi_reduction <add>, %345, %cst_99 [1] : vector<4x64xf32> to vector<4xf32>
    %347 = vector.shape_cast %346 : vector<4xf32> to vector<4x1xf32>
    %cst_100 = arith.constant 6.400000e+01 : f32
    %348 = vector.broadcast %cst_100 : f32 to vector<4x1xf32>
    %349 = arith.divf %347, %348 : vector<4x1xf32>
    %350 = vector.broadcast %342 : vector<4x1xf32> to vector<4x64xf32>
    %351 = arith.subf %336, %350 : vector<4x64xf32>
    %cst_101 = arith.constant 9.99999974E-6 : f32
    %352 = vector.broadcast %cst_101 : f32 to vector<4x1xf32>
    %353 = arith.addf %349, %352 : vector<4x1xf32>
    %354 = math.rsqrt %353 : vector<4x1xf32>
    %355 = vector.broadcast %354 : vector<4x1xf32> to vector<4x64xf32>
    %356 = arith.mulf %351, %355 : vector<4x64xf32>
    %357 = vector.broadcast %337 : vector<1x64xf32> to vector<4x64xf32>
    %358 = arith.mulf %356, %357 : vector<4x64xf32>
    %359 = vector.broadcast %338 : vector<1x64xf32> to vector<4x64xf32>
    %360 = arith.addf %358, %359 : vector<4x64xf32>
    %361 = arith.addf %296, %360 : vector<4x64xf32>
    %362 = vector.extract_strided_slice %3 {offsets = [9, 0], sizes = [1, 64], strides = [1, 1]} : vector<22x64xf32> to vector<1x64xf32>
    %363 = vector.broadcast %362 : vector<1x64xf32> to vector<4x64xf32>
    %364 = arith.mulf %361, %363 : vector<4x64xf32>
    %cst_102 = arith.constant dense<0.000000e+00> : vector<4xf32>
    %365 = vector.multi_reduction <add>, %364, %cst_102 [1] : vector<4x64xf32> to vector<4xf32>
    %366 = vector.shape_cast %365 : vector<4xf32> to vector<4x1xf32>
    %367 = vector.extract_strided_slice %3 {offsets = [10, 0], sizes = [1, 1], strides = [1, 1]} : vector<22x64xf32> to vector<1x1xf32>
    %368 = vector.broadcast %367 : vector<1x1xf32> to vector<4x1xf32>
    %369 = arith.addf %366, %368 : vector<4x1xf32>
    %370 = vector.shape_cast %369 : vector<4x1xf32> to vector<4x1xf32>
    %371 = vector.broadcast %370 : vector<4x1xf32> to vector<4x128xf32>
    %c0_103 = arith.constant 0 : index
    %c0_104 = arith.constant 0 : index
    %372 = vector.load %arg11[%c0_103, %c0_104] : memref<4x128xf32, #tpu.memory_space<vmem>>, vector<4x128xf32>
    tpu.vector_store %arg11[%c0_103, %c0_104], %371 {strides = array<i32>} : memref<4x128xf32, #tpu.memory_space<vmem>>, vector<4x128xf32>,
    return
  }
}

</mosaic_0001>

<llo_original>
// kernel: custom-call.1
$region0: #{custom-call.1}
  %s0 = inlined_call_operand.vmem [shape: f32[4,64], index: 0, kind: output, shape index: {}]

// kernel: next_basket_predictor_forward.1
$region0: #{next_basket_predictor_forward.1}
  #allocation0 [shape = 'u32[]', space=smem, size = 0x4, offset = 0x4, fixed_abs, tag = 'smem constant byte address 0x4 - core index']
  #allocation1 [shape = 'u32[144,128]{1,0:T(1,128)}', space=vmem, size = 0x12000, scoped, tag = 'internal scratch']
  %s0 = inlined_call_operand.vmem [shape: f32[4,128], index: 0, kind: input, shape index: {}]
  %s1 = inlined_call_operand.vmem [shape: f32[4,2], index: 1, kind: input, shape index: {}]
  %s2 = inlined_call_operand.vmem [shape: bf16[64,192], index: 2, kind: input, shape index: {}]
  %s3 = inlined_call_operand.vmem [shape: bf16[4,128,128], index: 3, kind: input, shape index: {}]
  %s4 = inlined_call_operand.vmem [shape: bf16[128,512], index: 4, kind: input, shape index: {}]
  %s5 = inlined_call_operand.vmem [shape: bf16[2,64,64], index: 5, kind: input, shape index: {}]
  %s6 = inlined_call_operand.vmem [shape: f32[12,128], index: 6, kind: input, shape index: {}]
  %s7 = inlined_call_operand.vmem [shape: f32[1,512], index: 7, kind: input, shape index: {}]
  %s8 = inlined_call_operand.vmem [shape: f32[22,64], index: 8, kind: input, shape index: {}]
  %s9 = inlined_call_operand.vmem [shape: f32[48,64], index: 9, kind: input, shape index: {}]
  %s10 = inlined_call_operand.hbm [shape: f32[4,512], index: 10, kind: output, shape index: {0}]
  %s11 = inlined_call_operand.vmem [shape: f32[4,128], index: 11, kind: output, shape index: {1}]
  %12 = xla_tuple %s10, %s11
  %s13 = sld [smem:[#allocation0]]
  $region58: #{next_basket_predictor_forward.1} parent=0
    _
  %s15 = ssub.s32 1, %s13
  %s16 = scalar_select 0, %s15, %s13
  $region1: #{next_basket_predictor_forward.1} parent=0
    #allocation2 [shape = 'u8[8192]{0}', space=vmem, size = 0x2000, scoped, tag = 'output window, operand 0, single buffered']
    #allocation3 [shape = 's32[1]{0}', space=sflag, size = 0x4, scoped, tag = 'scoped memory for next_basket_predictor_forward.1']
    %17 = vsyncpa [#allocation3], 0
    // Predicated region
    $region2: #{next_basket_predictor_forward.1} parent=1 // pred_check
      _
    $region3: #{next_basket_predictor_forward.1} parent=1 // pred_check_branch
      %19 = sbr.rel (0) target = $region5
    $region4: #{next_basket_predictor_forward.1} parent=1 // pred_region
      _
    $region5: #{next_basket_predictor_forward.1} parent=1 // pred_fallthru
      _
    // Predicated region
    $region6: #{next_basket_predictor_forward.1} parent=1 // pred_check
      _
    $region7: #{next_basket_predictor_forward.1} parent=1 // pred_check_branch
      %21 = sbr.rel (0) target = $region9
    $region8: #{next_basket_predictor_forward.1} parent=1 // pred_region
      _
    $region9: #{next_basket_predictor_forward.1} parent=1 // pred_fallthru
      _
    // Predicated region
    $region10: #{next_basket_predictor_forward.1} parent=1 // pred_check
      _
    $region11: #{next_basket_predictor_forward.1} parent=1 // pred_check_branch
      %23 = sbr.rel (0) target = $region13
    $region12: #{next_basket_predictor_forward.1} parent=1 // pred_region
      _
    $region13: #{next_basket_predictor_forward.1} parent=1 // pred_fallthru
      _
    // Predicated region
    $region14: #{next_basket_predictor_forward.1} parent=1 // pred_check
      _
    $region15: #{next_basket_predictor_forward.1} parent=1 // pred_check_branch
      %25 = sbr.rel (0) target = $region17
    $region16: #{next_basket_predictor_forward.1} parent=1 // pred_region
      _
    $region17: #{next_basket_predictor_forward.1} parent=1 // pred_fallthru
      _
    // Predicated region
    $region18: #{next_basket_predictor_forward.1} parent=1 // pred_check
      _
    $region19: #{next_basket_predictor_forward.1} parent=1 // pred_check_branch
      %27 = sbr.rel (0) target = $region21
    $region20: #{next_basket_predictor_forward.1} parent=1 // pred_region
      _
    $region21: #{next_basket_predictor_forward.1} parent=1 // pred_fallthru
      _
    // Predicated region
    $region22: #{next_basket_predictor_forward.1} parent=1 // pred_check
      _
    $region23: #{next_basket_predictor_forward.1} parent=1 // pred_check_branch
      %29 = sbr.rel (0) target = $region25
    $region24: #{next_basket_predictor_forward.1} parent=1 // pred_region
      _
    $region25: #{next_basket_predictor_forward.1} parent=1 // pred_fallthru
      _
    // Predicated region
    $region26: #{next_basket_predictor_forward.1} parent=1 // pred_check
      _
    $region27: #{next_basket_predictor_forward.1} parent=1 // pred_check_branch
      %31 = sbr.rel (0) target = $region29
    $region28: #{next_basket_predictor_forward.1} parent=1 // pred_region
      _
    $region29: #{next_basket_predictor_forward.1} parent=1 // pred_fallthru
      _
    // Predicated region
    $region30: #{next_basket_predictor_forward.1} parent=1 // pred_check
      _
    $region31: #{next_basket_predictor_forward.1} parent=1 // pred_check_branch
      %33 = sbr.rel (0) target = $region33
    $region32: #{next_basket_predictor_forward.1} parent=1 // pred_region
      _
    $region33: #{next_basket_predictor_forward.1} parent=1 // pred_fallthru
      _
    // Predicated region
    $region34: #{next_basket_predictor_forward.1} parent=1 // pred_check
      _
    $region35: #{next_basket_predictor_forward.1} parent=1 // pred_check_branch
      %35 = sbr.rel (0) target = $region37
    $region36: #{next_basket_predictor_forward.1} parent=1 // pred_region
      _
    $region37: #{next_basket_predictor_forward.1} parent=1 // pred_fallthru
      _
    // Predicated region
    $region38: #{next_basket_predictor_forward.1} parent=1 // pred_check
      _
    $region39: #{next_basket_predictor_forward.1} parent=1 // pred_check_branch
      %37 = sbr.rel (0) target = $region41
    $region40: #{next_basket_predictor_forward.1} parent=1 // pred_region
      _
    $region41: #{next_basket_predictor_forward.1} parent=1 // pred_fallthru
      _
    %v39 = vld [vmem:[%s0] sm:$0xf]
    %v40 = vld [vmem:[%s1] sm:$0xf]
    %v41 = vld [vmem:[%s6] sm:$0xff]
    %v42 = vld [vmem:[%s6 + $0x8] sm:$0xf]
    %v43 = vld [vmem:[%s8] sm:$0xff]
    %v44 = vld [vmem:[%s8 + $0x8] sm:$0xff]
    %v45 = vld [vmem:[%s8 + $0x10] sm:$0x3f]
    %47 = vset.pattern.permute.xlu0 0
    %48 = vperm.xlu0 %47, %v40
    %v49 = vpop.permute.xlu0 %48
    %v51 = vlaneseq
    %v52 = vshrl.u32 %v51, 7
    %v53 = vsub.s32 3, %v52
    %v54 = vrot.slane %v44, %v53
    %v55 = vmul.f32 %v49, %v54
    %56 = vset.pattern.permute.xlu0 1
    %57 = vperm.xlu0 %56, %v40
    %v58 = vpop.permute.xlu0 %57
    %v60 = vlaneseq
    %v61 = vshrl.u32 %v60, 7
    %v62 = vsub.s32 4, %v61
    %v63 = vrot.slane %v44, %v62
    %v64 = vmul.f32 %v58, %v63
    %v65 = vadd.f32 %v55, %v64
    %v66 = vlaneseq
    %v67 = vshrl.u32 %v66, 7
    %v68 = vsub.s32 5, %v67
    %v69 = vrot.slane %v44, %v68
    %v70 = vadd.f32 %v65, %v69
    %vm71 = vcmask 125952
    %v72 = vsel %vm71, %v70, 0.0
    %73 = vadd.xlane.f32.xlu0 %v72
    %v74 = vpop.xlane.xlu0 %73
    %v75 = vrcp.pop 16.0
    %v76 = vmul.f32 %v74, %v75
    %v77 = vsub.f32 %v70, %v76
    %v78 = vmul.f32 %v77, %v77
    %v79 = vsel %vm71, %v78, 0.0
    %80 = vadd.xlane.f32.xlu0 %v79
    %v81 = vpop.xlane.xlu0 %80
    %v82 = vmul.f32 %v81, %v75
    %v83 = vadd.f32 %v82, 1e-05
    %v84 = vrsqrt.pop %v83
    %v85 = vmul.f32 %v77, %v84
    %v86 = vlaneseq
    %v87 = vshrl.u32 %v86, 7
    %v88 = vsub.s32 6, %v87
    %v89 = vrot.slane %v44, %v88
    %v90 = vmul.f32 %v85, %v89
    %v91 = vlaneseq
    %v92 = vshrl.u32 %v91, 7
    %v93 = vsub.s32 7, %v92
    %v94 = vrot.slane %v44, %v93
    %v95 = vadd.f32 %v90, %v94
    %v96 = vmax.f32 %v95, 0.0
    %v97 = vld [vmem:[%s9] sm:$0xff]
    %v98 = vld [vmem:[%s9 + $0x8] sm:$0xff]
    %v99 = vlaneseq
    %v100 = vshrl.u32 %v99, 7
    %v101 = vsub.s32 0, %v100
    %v102 = vrot.slane %v45, %v101
    %vm103 = vcmask 130048
    %v105 = vsel %vm103, %v96, 0
    %107 = vmatprep.subr.mxu0 0.0
    %108 = vmatpush1.msra.mxu0 0.0
    %109 = vmatprep.subr.mxu0 0.0
    %110 = vmatpush1.msra.mxu0 0.0
    %111 = vmatprep.subr.mxu0 0.0
    %112 = vmatpush1.msra.mxu0 0.0
    %113 = vmatprep.subr.mxu0 0.0
    %114 = vmatpush1.msra.mxu0 0.0
    %115 = vmatprep.subr.mxu0 0.0
    %116 = vmatpush1.msra.mxu0 0.0
    %117 = vmatprep.subr.mxu0 0.0
    %118 = vmatpush1.msra.mxu0 0.0
    %119 = vmatprep.subr.mxu0 0.0
    %120 = vmatpush1.msra.mxu0 0.0
    %121 = vmatprep.subr.mxu0 0.0
    %122 = vmatpush1.msra.mxu0 0.0
    %123 = vmatprep.subr.mxu0 0.0
    %124 = vmatpush1.msra.mxu0 0.0
    %125 = vmatprep.subr.mxu0 0.0
    %126 = vmatpush1.msra.mxu0 0.0
    %127 = vmatprep.subr.mxu0 0.0
    %128 = vmatpush1.msra.mxu0 0.0
    %129 = vmatprep.subr.mxu0 0.0
    %130 = vmatpush1.msra.mxu0 0.0
    %131 = vmatprep.subr.mxu0 0.0
    %132 = vmatpush1.msra.mxu0 0.0
    %133 = vmatprep.subr.mxu0 0.0
    %134 = vmatpush1.msra.mxu0 0.0
    %135 = vmatprep.subr.mxu0 0.0
    %136 = vmatpush1.msra.mxu0 %v98
    %137 = vmatprep.subr.mxu0 0.0
    %138 = vmatpush1.msra.mxu0 %v97
    %139 = vmatprep.subr.mxu0 0.0
    %140 = vmatpush2.msra.mxu0 0.0
    %141 = vmatprep.subr.mxu0 0.0
    %142 = vmatpush2.msra.mxu0 0.0
    %143 = vmatprep.subr.mxu0 0.0
    %144 = vmatpush2.msra.mxu0 0.0
    %145 = vmatprep.subr.mxu0 0.0
    %146 = vmatpush2.msra.mxu0 0.0
    %147 = vmatprep.subr.mxu0 0.0
    %148 = vmatpush2.msra.mxu0 0.0
    %149 = vmatprep.subr.mxu0 0.0
    %150 = vmatpush2.msra.mxu0 0.0
    %151 = vmatprep.subr.mxu0 0.0
    %152 = vmatpush2.msra.mxu0 0.0
    %153 = vmatprep.subr.mxu0 0.0
    %154 = vmatpush2.msra.mxu0 0.0
    %155 = vmatprep.subr.mxu0 0.0
    %156 = vmatpush2.msra.mxu0 0.0
    %157 = vmatprep.subr.mxu0 0.0
    %158 = vmatpush2.msra.mxu0 0.0
    %159 = vmatprep.subr.mxu0 0.0
    %160 = vmatpush2.msra.mxu0 0.0
    %161 = vmatprep.subr.mxu0 0.0
    %162 = vmatpush2.msra.mxu0 0.0
    %163 = vmatprep.subr.mxu0 0.0
    %164 = vmatpush2.msra.mxu0 0.0
    %165 = vmatprep.subr.mxu0 0.0
    %166 = vmatpush2.msra.mxu0 0.0
    %167 = vmatprep.subr.mxu0 0.0
    %168 = vmatpush2.msra.mxu0 0.0
    %169 = vmatprep.subr.mxu0 0.0
    %170 = vmatpush2.msra.mxu0 0.0
    %171 = vmatprep.mubr.f32.mxu0 0.0
    %172 = vmatmul.mubr.f32.gmra.mxu0 %v105
    %v173 = vpop.f32.mrf.mxu0
    %v174 = vadd.f32 %v102, %v173
    %v175 = vpop.f32.mrf.mxu0
    %176 = vdwg.mxu0
    %vm177 = vcmask 257024
    %v178 = vsel %vm177, %v174, 0.0
    %179 = vadd.xlane.f32.xlu0 %v178
    %v180 = vpop.xlane.xlu0 %179
    %v181 = vrcp.pop 32.0
    %v182 = vmul.f32 %v180, %v181
    %v183 = vsub.f32 %v174, %v182
    %v184 = vmul.f32 %v183, %v183
    %v185 = vsel %vm177, %v184, 0.0
    %186 = vadd.xlane.f32.xlu0 %v185
    %v187 = vpop.xlane.xlu0 %186
    %v188 = vmul.f32 %v187, %v181
    %v189 = vadd.f32 %v188, 1e-05
    %v190 = vrsqrt.pop %v189
    %v191 = vmul.f32 %v183, %v190
    %v192 = vlaneseq
    %v193 = vshrl.u32 %v192, 7
    %v194 = vsub.s32 1, %v193
    %v195 = vrot.slane %v45, %v194
    %v196 = vmul.f32 %v191, %v195
    %v197 = vlaneseq
    %v198 = vshrl.u32 %v197, 7
    %v199 = vsub.s32 2, %v198
    %v200 = vrot.slane %v45, %v199
    %v201 = vadd.f32 %v196, %v200
    %v202 = vmax.f32 %v201, 0.0
    %s203 = scalar_lea.vmem %s3, 192
    %v204 = vld [vmem:[%s203] sm:$0xf]
    %v205 = vld [vmem:[%s203 + $0x4] sm:$0xf]
    %v206 = vld [vmem:[%s203 + $0x8] sm:$0xf]
    %v207 = vld [vmem:[%s203 + $0xc] sm:$0xf]
    %v208 = vld [vmem:[%s203 + $0x10] sm:$0xf]
    %v209 = vld [vmem:[%s203 + $0x14] sm:$0xf]
    %v210 = vld [vmem:[%s203 + $0x18] sm:$0xf]
    %v211 = vld [vmem:[%s203 + $0x1c] sm:$0xf]
    %v212 = vld [vmem:[%s203 + $0x20] sm:$0xf]
    %v213 = vld [vmem:[%s203 + $0x24] sm:$0xf]
    %v214 = vld [vmem:[%s203 + $0x28] sm:$0xf]
    %v215 = vld [vmem:[%s203 + $0x2c] sm:$0xf]
    %v216 = vld [vmem:[%s203 + $0x30] sm:$0xf]
    %v217 = vld [vmem:[%s203 + $0x34] sm:$0xf]
    %v218 = vld [vmem:[%s203 + $0x38] sm:$0xf]
    %v219 = vld [vmem:[%s203 + $0x3c] sm:$0xf]
    %v220 = vpack.c.bf16 %v39, %v39
    %v237 = vunpack.c.l.b16 %v204
    %v238 = vunpack.c.l.b16 %v205
    %v239 = vunpack.c.l.b16 %v206
    %v240 = vunpack.c.l.b16 %v207
    %v241 = vunpack.c.l.b16 %v208
    %v242 = vunpack.c.l.b16 %v209
    %v243 = vunpack.c.l.b16 %v210
    %v244 = vunpack.c.l.b16 %v211
    %v245 = vunpack.c.l.b16 %v212
    %v246 = vunpack.c.l.b16 %v213
    %v247 = vunpack.c.l.b16 %v214
    %v248 = vunpack.c.l.b16 %v215
    %v249 = vunpack.c.l.b16 %v216
    %v250 = vunpack.c.l.b16 %v217
    %v251 = vunpack.c.l.b16 %v218
    %v252 = vunpack.c.l.b16 %v219
    %v253 = vpack.c.b16 %v238, %v237
    %v254 = vpack.c.b16 %v240, %v239
    %v255 = vpack.c.b16 %v242, %v241
    %v256 = vpack.c.b16 %v244, %v243
    %v257 = vpack.c.b16 %v246, %v245
    %v258 = vpack.c.b16 %v248, %v247
    %v259 = vpack.c.b16 %v250, %v249
    %v260 = vpack.c.b16 %v252, %v251
    %269 = vmatprep.subr.bf16.mxu0 0
    %270 = vmatpush1.bf16.msra.mxu0 %v260
    %271 = vmatprep.subr.bf16.mxu0 0
    %272 = vmatpush1.bf16.msra.mxu0 %v259
    %273 = vmatprep.subr.bf16.mxu0 0
    %274 = vmatpush1.bf16.msra.mxu0 %v258
    %275 = vmatprep.subr.bf16.mxu0 0
    %276 = vmatpush1.bf16.msra.mxu0 %v257
    %277 = vmatprep.subr.bf16.mxu0 0
    %278 = vmatpush1.bf16.msra.mxu0 %v256
    %279 = vmatprep.subr.bf16.mxu0 0
    %280 = vmatpush1.bf16.msra.mxu0 %v255
    %281 = vmatprep.subr.bf16.mxu0 0
    %282 = vmatpush1.bf16.msra.mxu0 %v254
    %283 = vmatprep.subr.bf16.mxu0 0
    %284 = vmatpush1.bf16.msra.mxu0 %v253
    %285 = vmatprep.subr.bf16.mxu0 0
    %286 = vmatpush2.bf16.msra.mxu0 0
    %287 = vmatprep.subr.bf16.mxu0 0
    %288 = vmatpush2.bf16.msra.mxu0 0
    %289 = vmatprep.subr.bf16.mxu0 0
    %290 = vmatpush2.bf16.msra.mxu0 0
    %291 = vmatprep.subr.bf16.mxu0 0
    %292 = vmatpush2.bf16.msra.mxu0 0
    %293 = vmatprep.subr.bf16.mxu0 0
    %294 = vmatpush2.bf16.msra.mxu0 0
    %295 = vmatprep.subr.bf16.mxu0 0
    %296 = vmatpush2.bf16.msra.mxu0 0
    %297 = vmatprep.subr.bf16.mxu0 0
    %298 = vmatpush2.bf16.msra.mxu0 0
    %299 = vmatprep.subr.bf16.mxu0 0
    %300 = vmatpush2.bf16.msra.mxu0 0
    %301 = vmatprep.mubr.bf16.mxu0 0
    %302 = vmatmul.mubr.bf16.gmra.mxu0 %v220
    %v303 = vpop.f32.mrf.mxu0
    %v304 = vadd.f32 0.0, %v303
    %v305 = vpop.f32.mrf.mxu0
    %v306 = vpop.f32.mrf.mxu0
    %v307 = vpop.f32.mrf.mxu0
    %308 = vdwg.mxu0
    %v309 = vld [vmem:[%s9 + $0x10] sm:$0xff]
    %v310 = vld [vmem:[%s9 + $0x18] sm:$0xff]
    %v311 = vld [vmem:[%s9 + $0x20] sm:$0xff]
    %v312 = vld [vmem:[%s9 + $0x28] sm:$0xff]
    %vm313 = vcmask 261120
    %v315 = vsel %vm313, %v202, 0
    %317 = vmatprep.subr.mxu0 0.0
    %318 = vmatpush1.msra.mxu0 0.0
    %319 = vmatprep.subr.mxu0 0.0
    %320 = vmatpush1.msra.mxu0 0.0
    %321 = vmatprep.subr.mxu0 0.0
    %322 = vmatpush1.msra.mxu0 0.0
    %323 = vmatprep.subr.mxu0 0.0
    %324 = vmatpush1.msra.mxu0 0.0
    %325 = vmatprep.subr.mxu0 0.0
    %326 = vmatpush1.msra.mxu0 0.0
    %327 = vmatprep.subr.mxu0 0.0
    %328 = vmatpush1.msra.mxu0 0.0
    %329 = vmatprep.subr.mxu0 0.0
    %330 = vmatpush1.msra.mxu0 0.0
    %331 = vmatprep.subr.mxu0 0.0
    %332 = vmatpush1.msra.mxu0 0.0
    %333 = vmatprep.subr.mxu0 0.0
    %334 = vmatpush1.msra.mxu0 0.0
    %335 = vmatprep.subr.mxu0 0.0
    %336 = vmatpush1.msra.mxu0 0.0
    %337 = vmatprep.subr.mxu0 0.0
    %338 = vmatpush1.msra.mxu0 0.0
    %339 = vmatprep.subr.mxu0 0.0
    %340 = vmatpush1.msra.mxu0 0.0
    %341 = vmatprep.subr.mxu0 0.0
    %342 = vmatpush1.msra.mxu0 %v312
    %343 = vmatprep.subr.mxu0 0.0
    %344 = vmatpush1.msra.mxu0 %v311
    %345 = vmatprep.subr.mxu0 0.0
    %346 = vmatpush1.msra.mxu0 %v310
    %347 = vmatprep.subr.mxu0 0.0
    %348 = vmatpush1.msra.mxu0 %v309
    %349 = vmatprep.subr.mxu0 0.0
    %350 = vmatpush2.msra.mxu0 0.0
    %351 = vmatprep.subr.mxu0 0.0
    %352 = vmatpush2.msra.mxu0 0.0
    %353 = vmatprep.subr.mxu0 0.0
    %354 = vmatpush2.msra.mxu0 0.0
    %355 = vmatprep.subr.mxu0 0.0
    %356 = vmatpush2.msra.mxu0 0.0
    %357 = vmatprep.subr.mxu0 0.0
    %358 = vmatpush2.msra.mxu0 0.0
    %359 = vmatprep.subr.mxu0 0.0
    %360 = vmatpush2.msra.mxu0 0.0
    %361 = vmatprep.subr.mxu0 0.0
    %362 = vmatpush2.msra.mxu0 0.0
    %363 = vmatprep.subr.mxu0 0.0
    %364 = vmatpush2.msra.mxu0 0.0
    %365 = vmatprep.subr.mxu0 0.0
    %366 = vmatpush2.msra.mxu0 0.0
    %367 = vmatprep.subr.mxu0 0.0
    %368 = vmatpush2.msra.mxu0 0.0
    %369 = vmatprep.subr.mxu0 0.0
    %370 = vmatpush2.msra.mxu0 0.0
    %371 = vmatprep.subr.mxu0 0.0
    %372 = vmatpush2.msra.mxu0 0.0
    %373 = vmatprep.subr.mxu0 0.0
    %374 = vmatpush2.msra.mxu0 0.0
    %375 = vmatprep.subr.mxu0 0.0
    %376 = vmatpush2.msra.mxu0 0.0
    %377 = vmatprep.subr.mxu0 0.0
    %378 = vmatpush2.msra.mxu0 0.0
    %379 = vmatprep.subr.mxu0 0.0
    %380 = vmatpush2.msra.mxu0 0.0
    %381 = vmatprep.mubr.f32.mxu0 0.0
    %382 = vmatmul.mubr.f32.gmra.mxu0 %v315
    %v383 = vpop.f32.mrf.mxu0
    %v384 = vadd.f32 0.0, %v383
    %v385 = vpop.f32.mrf.mxu0
    %386 = vdwg.mxu0
    %v387 = vadd.f32 %v304, %v384
    %v388 = vlaneseq
    %v389 = vshrl.u32 %v388, 7
    %v390 = vsub.s32 3, %v389
    %v391 = vrot.slane %v45, %v390
    %v392 = vadd.f32 %v387, %v391
    %vm393 = vcmask 519168
    %v394 = vsel %vm393, %v392, 0.0
    %395 = vadd.xlane.f32.xlu0 %v394
    %v396 = vpop.xlane.xlu0 %395
    %v397 = vrcp.pop 64.0
    %v398 = vmul.f32 %v396, %v397
    %v399 = vsub.f32 %v392, %v398
    %v400 = vmul.f32 %v399, %v399
    %v401 = vsel %vm393, %v400, 0.0
    %402 = vadd.xlane.f32.xlu0 %v401
    %v403 = vpop.xlane.xlu0 %402
    %v404 = vmul.f32 %v403, %v397
    %v405 = vadd.f32 %v404, 1e-05
    %v406 = vrsqrt.pop %v405
    %v407 = vmul.f32 %v399, %v406
    %v408 = vlaneseq
    %v409 = vshrl.u32 %v408, 7
    %v410 = vsub.s32 4, %v409
    %v411 = vrot.slane %v45, %v410
    %v412 = vmul.f32 %v407, %v411
    %v413 = vlaneseq
    %v414 = vshrl.u32 %v413, 7
    %v415 = vsub.s32 5, %v414
    %v416 = vrot.slane %v45, %v415
    %v417 = vadd.f32 %v412, %v416
    %v418 = vmax.f32 %v417, 0.0
    %v419 = vld [vmem:[%s2] sm:$0xff]
    %v420 = vld [vmem:[%s2 + $0x8] sm:$0xff]
    %v421 = vld [vmem:[%s2 + $0x10] sm:$0xff]
    %v422 = vld [vmem:[%s2 + $0x18] sm:$0xff]
    %v423 = vld [vmem:[%s2 + $0x20] sm:$0xff]
    %v424 = vld [vmem:[%s2 + $0x28] sm:$0xff]
    %v425 = vld [vmem:[%s2 + $0x30] sm:$0xff]
    %v426 = vld [vmem:[%s2 + $0x38] sm:$0xff]
    %v427 = vpack.c.bf16 %v418, %v418
    %v436 = vunpack.c.l.b16 %v419
    %v437 = vunpack.c.h.b16 %v419
    %v438 = vunpack.c.l.b16 %v420
    %v439 = vunpack.c.h.b16 %v420
    %v440 = vunpack.c.l.b16 %v421
    %v441 = vunpack.c.h.b16 %v421
    %v442 = vunpack.c.l.b16 %v422
    %v443 = vunpack.c.h.b16 %v422
    %v444 = vunpack.c.l.b16 %v423
    %v445 = vunpack.c.h.b16 %v423
    %v446 = vunpack.c.l.b16 %v424
    %v447 = vunpack.c.h.b16 %v424
    %v448 = vunpack.c.l.b16 %v425
    %v449 = vunpack.c.h.b16 %v425
    %v450 = vunpack.c.l.b16 %v426
    %v451 = vunpack.c.h.b16 %v426
    %v452 = vpack.c.b16 %v438, %v436
    %v453 = vpack.c.b16 %v439, %v437
    %v454 = vpack.c.b16 %v442, %v440
    %v455 = vpack.c.b16 %v443, %v441
    %v456 = vpack.c.b16 %v446, %v444
    %v457 = vpack.c.b16 %v447, %v445
    %v458 = vpack.c.b16 %v450, %v448
    %v459 = vpack.c.b16 %v451, %v449
    %vm468 = vcmask 523264
    %v470 = vsel %vm468, %v427, 0
    %472 = vmatprep.subr.bf16.mxu0 0
    %473 = vmatpush1.bf16.msra.mxu0 0
    %474 = vmatprep.subr.bf16.mxu0 0
    %475 = vmatpush1.bf16.msra.mxu0 0
    %476 = vmatprep.subr.bf16.mxu0 0
    %477 = vmatpush1.bf16.msra.mxu0 0
    %478 = vmatprep.subr.bf16.mxu0 0
    %479 = vmatpush1.bf16.msra.mxu0 0
    %480 = vmatprep.subr.bf16.mxu0 %v459
    %481 = vmatpush1.bf16.msra.mxu0 %v458
    %482 = vmatprep.subr.bf16.mxu0 %v457
    %483 = vmatpush1.bf16.msra.mxu0 %v456
    %484 = vmatprep.subr.bf16.mxu0 %v455
    %485 = vmatpush1.bf16.msra.mxu0 %v454
    %486 = vmatprep.subr.bf16.mxu0 %v453
    %487 = vmatpush1.bf16.msra.mxu0 %v452
    %488 = vmatprep.subr.bf16.mxu0 0
    %489 = vmatpush2.bf16.msra.mxu0 0
    %490 = vmatprep.subr.bf16.mxu0 0
    %491 = vmatpush2.bf16.msra.mxu0 0
    %492 = vmatprep.subr.bf16.mxu0 0
    %493 = vmatpush2.bf16.msra.mxu0 0
    %494 = vmatprep.subr.bf16.mxu0 0
    %495 = vmatpush2.bf16.msra.mxu0 0
    %496 = vmatprep.subr.bf16.mxu0 0
    %497 = vmatpush2.bf16.msra.mxu0 0
    %498 = vmatprep.subr.bf16.mxu0 0
    %499 = vmatpush2.bf16.msra.mxu0 0
    %500 = vmatprep.subr.bf16.mxu0 0
    %501 = vmatpush2.bf16.msra.mxu0 0
    %502 = vmatprep.subr.bf16.mxu0 0
    %503 = vmatpush2.bf16.msra.mxu0 0
    %504 = vmatprep.mubr.bf16.mxu0 0
    %505 = vmatmul.mubr.bf16.gmra.mxu0 %v470
    %v506 = vpop.f32.mrf.mxu0
    %v507 = vadd.f32 0.0, %v506
    %v508 = vpop.f32.mrf.mxu0
    %v509 = vadd.f32 0.0, %v508
    %v510 = vpop.f32.mrf.mxu0
    %v511 = vpop.f32.mrf.mxu0
    %512 = vdwg.mxu0
    %v513 = vlaneseq
    %v514 = vshrl.u32 %v513, 7
    %v515 = vsub.s32 0, %v514
    %v516 = vrot.slane %v41, %v515
    %v517 = vadd.f32 %v507, %v516
    %vm518 = vcmask 1043456
    %v519 = vsel %vm518, %v517, 0.0
    %520 = vadd.xlane.f32.xlu0 %v519
    %v521 = vpop.xlane.xlu0 %520
    %v522 = vrcp.pop 128.0
    %v523 = vmul.f32 %v521, %v522
    %v524 = vsub.f32 %v517, %v523
    %v525 = vmul.f32 %v524, %v524
    %v526 = vsel %vm518, %v525, 0.0
    %527 = vadd.xlane.f32.xlu0 %v526
    %v528 = vpop.xlane.xlu0 %527
    %v529 = vmul.f32 %v528, %v522
    %v530 = vadd.f32 %v529, 1e-05
    %v531 = vrsqrt.pop %v530
    %v532 = vmul.f32 %v524, %v531
    %v533 = vlaneseq
    %v534 = vshrl.u32 %v533, 7
    %v535 = vsub.s32 1, %v534
    %v536 = vrot.slane %v41, %v535
    %v537 = vmul.f32 %v532, %v536
    %v538 = vlaneseq
    %v539 = vshrl.u32 %v538, 7
    %v540 = vsub.s32 2, %v539
    %v541 = vrot.slane %v41, %v540
    %v542 = vadd.f32 %v537, %v541
    %v543 = vmax.f32 %v542, 0.0
    %v544 = vld [vmem:[%s3] sm:$0xf]
    %v545 = vld [vmem:[%s3 + $0x4] sm:$0xf]
    %v546 = vld [vmem:[%s3 + $0x8] sm:$0xf]
    %v547 = vld [vmem:[%s3 + $0xc] sm:$0xf]
    %v548 = vld [vmem:[%s3 + $0x10] sm:$0xf]
    %v549 = vld [vmem:[%s3 + $0x14] sm:$0xf]
    %v550 = vld [vmem:[%s3 + $0x18] sm:$0xf]
    %v551 = vld [vmem:[%s3 + $0x1c] sm:$0xf]
    %v552 = vld [vmem:[%s3 + $0x20] sm:$0xf]
    %v553 = vld [vmem:[%s3 + $0x24] sm:$0xf]
    %v554 = vld [vmem:[%s3 + $0x28] sm:$0xf]
    %v555 = vld [vmem:[%s3 + $0x2c] sm:$0xf]
    %v556 = vld [vmem:[%s3 + $0x30] sm:$0xf]
    %v557 = vld [vmem:[%s3 + $0x34] sm:$0xf]
    %v558 = vld [vmem:[%s3 + $0x38] sm:$0xf]
    %v559 = vld [vmem:[%s3 + $0x3c] sm:$0xf]
    %v560 = vpack.c.bf16 %v543, %v543
    %v561 = vlaneseq
    %v562 = vshrl.u32 %v561, 7
    %v563 = vsub.s32 3, %v562
    %v564 = vrot.slane %v41, %v563
    %v581 = vunpack.c.l.b16 %v544
    %v582 = vunpack.c.l.b16 %v545
    %v583 = vunpack.c.l.b16 %v546
    %v584 = vunpack.c.l.b16 %v547
    %v585 = vunpack.c.l.b16 %v548
    %v586 = vunpack.c.l.b16 %v549
    %v587 = vunpack.c.l.b16 %v550
    %v588 = vunpack.c.l.b16 %v551
    %v589 = vunpack.c.l.b16 %v552
    %v590 = vunpack.c.l.b16 %v553
    %v591 = vunpack.c.l.b16 %v554
    %v592 = vunpack.c.l.b16 %v555
    %v593 = vunpack.c.l.b16 %v556
    %v594 = vunpack.c.l.b16 %v557
    %v595 = vunpack.c.l.b16 %v558
    %v596 = vunpack.c.l.b16 %v559
    %v597 = vpack.c.b16 %v582, %v581
    %v598 = vpack.c.b16 %v584, %v583
    %v599 = vpack.c.b16 %v586, %v585
    %v600 = vpack.c.b16 %v588, %v587
    %v601 = vpack.c.b16 %v590, %v589
    %v602 = vpack.c.b16 %v592, %v591
    %v603 = vpack.c.b16 %v594, %v593
    %v604 = vpack.c.b16 %v596, %v595
    %613 = vmatprep.subr.bf16.mxu0 0
    %614 = vmatpush1.bf16.msra.mxu0 %v604
    %615 = vmatprep.subr.bf16.mxu0 0
    %616 = vmatpush1.bf16.msra.mxu0 %v603
    %617 = vmatprep.subr.bf16.mxu0 0
    %618 = vmatpush1.bf16.msra.mxu0 %v602
    %619 = vmatprep.subr.bf16.mxu0 0
    %620 = vmatpush1.bf16.msra.mxu0 %v601
    %621 = vmatprep.subr.bf16.mxu0 0
    %622 = vmatpush1.bf16.msra.mxu0 %v600
    %623 = vmatprep.subr.bf16.mxu0 0
    %624 = vmatpush1.bf16.msra.mxu0 %v599
    %625 = vmatprep.subr.bf16.mxu0 0
    %626 = vmatpush1.bf16.msra.mxu0 %v598
    %627 = vmatprep.subr.bf16.mxu0 0
    %628 = vmatpush1.bf16.msra.mxu0 %v597
    %629 = vmatprep.subr.bf16.mxu0 0
    %630 = vmatpush2.bf16.msra.mxu0 0
    %631 = vmatprep.subr.bf16.mxu0 0
    %632 = vmatpush2.bf16.msra.mxu0 0
    %633 = vmatprep.subr.bf16.mxu0 0
    %634 = vmatpush2.bf16.msra.mxu0 0
    %635 = vmatprep.subr.bf16.mxu0 0
    %636 = vmatpush2.bf16.msra.mxu0 0
    %637 = vmatprep.subr.bf16.mxu0 0
    %638 = vmatpush2.bf16.msra.mxu0 0
    %639 = vmatprep.subr.bf16.mxu0 0
    %640 = vmatpush2.bf16.msra.mxu0 0
    %641 = vmatprep.subr.bf16.mxu0 0
    %642 = vmatpush2.bf16.msra.mxu0 0
    %643 = vmatprep.subr.bf16.mxu0 0
    %644 = vmatpush2.bf16.msra.mxu0 0
    %645 = vmatprep.mubr.bf16.mxu0 0
    %646 = vmatmul.mubr.bf16.gmra.mxu0 %v560
    %v647 = vpop.f32.mrf.mxu0
    %v648 = vadd.f32 %v564, %v647
    %v649 = vpop.f32.mrf.mxu0
    %v650 = vpop.f32.mrf.mxu0
    %v651 = vpop.f32.mrf.mxu0
    %652 = vdwg.mxu0
    %v653 = vsel %vm518, %v648, 0.0
    %654 = vadd.xlane.f32.xlu0 %v653
    %v655 = vpop.xlane.xlu0 %654
    %v656 = vmul.f32 %v655, %v522
    %v657 = vsub.f32 %v648, %v656
    %v658 = vmul.f32 %v657, %v657
    %v659 = vsel %vm518, %v658, 0.0
    %660 = vadd.xlane.f32.xlu0 %v659
    %v661 = vpop.xlane.xlu0 %660
    %v662 = vmul.f32 %v661, %v522
    %v663 = vadd.f32 %v662, 1e-05
    %v664 = vrsqrt.pop %v663
    %v665 = vmul.f32 %v657, %v664
    %v666 = vlaneseq
    %v667 = vshrl.u32 %v666, 7
    %v668 = vsub.s32 4, %v667
    %v669 = vrot.slane %v41, %v668
    %v670 = vmul.f32 %v665, %v669
    %v671 = vlaneseq
    %v672 = vshrl.u32 %v671, 7
    %v673 = vsub.s32 5, %v672
    %v674 = vrot.slane %v41, %v673
    %v675 = vadd.f32 %v670, %v674
    %v676 = vmax.f32 %v675, 0.0
    %s677 = scalar_lea.vmem %s3, 64
    %v678 = vld [vmem:[%s677] sm:$0xf]
    %v679 = vld [vmem:[%s677 + $0x4] sm:$0xf]
    %v680 = vld [vmem:[%s677 + $0x8] sm:$0xf]
    %v681 = vld [vmem:[%s677 + $0xc] sm:$0xf]
    %v682 = vld [vmem:[%s677 + $0x10] sm:$0xf]
    %v683 = vld [vmem:[%s677 + $0x14] sm:$0xf]
    %v684 = vld [vmem:[%s677 + $0x18] sm:$0xf]
    %v685 = vld [vmem:[%s677 + $0x1c] sm:$0xf]
    %v686 = vld [vmem:[%s677 + $0x20] sm:$0xf]
    %v687 = vld [vmem:[%s677 + $0x24] sm:$0xf]
    %v688 = vld [vmem:[%s677 + $0x28] sm:$0xf]
    %v689 = vld [vmem:[%s677 + $0x2c] sm:$0xf]
    %v690 = vld [vmem:[%s677 + $0x30] sm:$0xf]
    %v691 = vld [vmem:[%s677 + $0x34] sm:$0xf]
    %v692 = vld [vmem:[%s677 + $0x38] sm:$0xf]
    %v693 = vld [vmem:[%s677 + $0x3c] sm:$0xf]
    %v694 = vpack.c.bf16 %v676, %v676
    %v695 = vlaneseq
    %v696 = vshrl.u32 %v695, 7
    %v697 = vsub.s32 6, %v696
    %v698 = vrot.slane %v41, %v697
    %v715 = vunpack.c.l.b16 %v678
    %v716 = vunpack.c.l.b16 %v679
    %v717 = vunpack.c.l.b16 %v680
    %v718 = vunpack.c.l.b16 %v681
    %v719 = vunpack.c.l.b16 %v682
    %v720 = vunpack.c.l.b16 %v683
    %v721 = vunpack.c.l.b16 %v684
    %v722 = vunpack.c.l.b16 %v685
    %v723 = vunpack.c.l.b16 %v686
    %v724 = vunpack.c.l.b16 %v687
    %v725 = vunpack.c.l.b16 %v688
    %v726 = vunpack.c.l.b16 %v689
    %v727 = vunpack.c.l.b16 %v690
    %v728 = vunpack.c.l.b16 %v691
    %v729 = vunpack.c.l.b16 %v692
    %v730 = vunpack.c.l.b16 %v693
    %v731 = vpack.c.b16 %v716, %v715
    %v732 = vpack.c.b16 %v718, %v717
    %v733 = vpack.c.b16 %v720, %v719
    %v734 = vpack.c.b16 %v722, %v721
    %v735 = vpack.c.b16 %v724, %v723
    %v736 = vpack.c.b16 %v726, %v725
    %v737 = vpack.c.b16 %v728, %v727
    %v738 = vpack.c.b16 %v730, %v729
    %747 = vmatprep.subr.bf16.mxu0 0
    %748 = vmatpush1.bf16.msra.mxu0 %v738
    %749 = vmatprep.subr.bf16.mxu0 0
    %750 = vmatpush1.bf16.msra.mxu0 %v737
    %751 = vmatprep.subr.bf16.mxu0 0
    %752 = vmatpush1.bf16.msra.mxu0 %v736
    %753 = vmatprep.subr.bf16.mxu0 0
    %754 = vmatpush1.bf16.msra.mxu0 %v735
    %755 = vmatprep.subr.bf16.mxu0 0
    %756 = vmatpush1.bf16.msra.mxu0 %v734
    %757 = vmatprep.subr.bf16.mxu0 0
    %758 = vmatpush1.bf16.msra.mxu0 %v733
    %759 = vmatprep.subr.bf16.mxu0 0
    %760 = vmatpush1.bf16.msra.mxu0 %v732
    %761 = vmatprep.subr.bf16.mxu0 0
    %762 = vmatpush1.bf16.msra.mxu0 %v731
    %763 = vmatprep.subr.bf16.mxu0 0
    %764 = vmatpush2.bf16.msra.mxu0 0
    %765 = vmatprep.subr.bf16.mxu0 0
    %766 = vmatpush2.bf16.msra.mxu0 0
    %767 = vmatprep.subr.bf16.mxu0 0
    %768 = vmatpush2.bf16.msra.mxu0 0
    %769 = vmatprep.subr.bf16.mxu0 0
    %770 = vmatpush2.bf16.msra.mxu0 0
    %771 = vmatprep.subr.bf16.mxu0 0
    %772 = vmatpush2.bf16.msra.mxu0 0
    %773 = vmatprep.subr.bf16.mxu0 0
    %774 = vmatpush2.bf16.msra.mxu0 0
    %775 = vmatprep.subr.bf16.mxu0 0
    %776 = vmatpush2.bf16.msra.mxu0 0
    %777 = vmatprep.subr.bf16.mxu0 0
    %778 = vmatpush2.bf16.msra.mxu0 0
    %779 = vmatprep.mubr.bf16.mxu0 0
    %780 = vmatmul.mubr.bf16.gmra.mxu0 %v694
    %v781 = vpop.f32.mrf.mxu0
    %v782 = vadd.f32 %v698, %v781
    %v783 = vpop.f32.mrf.mxu0
    %v784 = vpop.f32.mrf.mxu0
    %v785 = vpop.f32.mrf.mxu0
    %786 = vdwg.mxu0
    %v787 = vsel %vm518, %v782, 0.0
    %788 = vadd.xlane.f32.xlu0 %v787
    %v789 = vpop.xlane.xlu0 %788
    %v790 = vmul.f32 %v789, %v522
    %v791 = vsub.f32 %v782, %v790
    %v792 = vmul.f32 %v791, %v791
    %v793 = vsel %vm518, %v792, 0.0
    %794 = vadd.xlane.f32.xlu0 %v793
    %v795 = vpop.xlane.xlu0 %794
    %v796 = vmul.f32 %v795, %v522
    %v797 = vadd.f32 %v796, 1e-05
    %v798 = vrsqrt.pop %v797
    %v799 = vmul.f32 %v791, %v798
    %v800 = vlaneseq
    %v801 = vshrl.u32 %v800, 7
    %v802 = vsub.s32 7, %v801
    %v803 = vrot.slane %v41, %v802
    %v804 = vmul.f32 %v799, %v803
    %v805 = vlaneseq
    %v806 = vshrl.u32 %v805, 7
    %v807 = vsub.s32 0, %v806
    %v808 = vrot.slane %v42, %v807
    %v809 = vadd.f32 %v804, %v808
    %v810 = vadd.f32 %v543, %v809
    %s811 = scalar_lea.vmem %s3, 128
    %v812 = vld [vmem:[%s811] sm:$0xf]
    %v813 = vld [vmem:[%s811 + $0x4] sm:$0xf]
    %v814 = vld [vmem:[%s811 + $0x8] sm:$0xf]
    %v815 = vld [vmem:[%s811 + $0xc] sm:$0xf]
    %v816 = vld [vmem:[%s811 + $0x10] sm:$0xf]
    %v817 = vld [vmem:[%s811 + $0x14] sm:$0xf]
    %v818 = vld [vmem:[%s811 + $0x18] sm:$0xf]
    %v819 = vld [vmem:[%s811 + $0x1c] sm:$0xf]
    %v820 = vld [vmem:[%s811 + $0x20] sm:$0xf]
    %v821 = vld [vmem:[%s811 + $0x24] sm:$0xf]
    %v822 = vld [vmem:[%s811 + $0x28] sm:$0xf]
    %v823 = vld [vmem:[%s811 + $0x2c] sm:$0xf]
    %v824 = vld [vmem:[%s811 + $0x30] sm:$0xf]
    %v825 = vld [vmem:[%s811 + $0x34] sm:$0xf]
    %v826 = vld [vmem:[%s811 + $0x38] sm:$0xf]
    %v827 = vld [vmem:[%s811 + $0x3c] sm:$0xf]
    %v828 = vpack.c.bf16 %v810, %v810
    %v829 = vlaneseq
    %v830 = vshrl.u32 %v829, 7
    %v831 = vsub.s32 1, %v830
    %v832 = vrot.slane %v42, %v831
    %v849 = vunpack.c.l.b16 %v812
    %v850 = vunpack.c.l.b16 %v813
    %v851 = vunpack.c.l.b16 %v814
    %v852 = vunpack.c.l.b16 %v815
    %v853 = vunpack.c.l.b16 %v816
    %v854 = vunpack.c.l.b16 %v817
    %v855 = vunpack.c.l.b16 %v818
    %v856 = vunpack.c.l.b16 %v819
    %v857 = vunpack.c.l.b16 %v820
    %v858 = vunpack.c.l.b16 %v821
    %v859 = vunpack.c.l.b16 %v822
    %v860 = vunpack.c.l.b16 %v823
    %v861 = vunpack.c.l.b16 %v824
    %v862 = vunpack.c.l.b16 %v825
    %v863 = vunpack.c.l.b16 %v826
    %v864 = vunpack.c.l.b16 %v827
    %v865 = vpack.c.b16 %v850, %v849
    %v866 = vpack.c.b16 %v852, %v851
    %v867 = vpack.c.b16 %v854, %v853
    %v868 = vpack.c.b16 %v856, %v855
    %v869 = vpack.c.b16 %v858, %v857
    %v870 = vpack.c.b16 %v860, %v859
    %v871 = vpack.c.b16 %v862, %v861
    %v872 = vpack.c.b16 %v864, %v863
    %881 = vmatprep.subr.bf16.mxu0 0
    %882 = vmatpush1.bf16.msra.mxu0 %v872
    %883 = vmatprep.subr.bf16.mxu0 0
    %884 = vmatpush1.bf16.msra.mxu0 %v871
    %885 = vmatprep.subr.bf16.mxu0 0
    %886 = vmatpush1.bf16.msra.mxu0 %v870
    %887 = vmatprep.subr.bf16.mxu0 0
    %888 = vmatpush1.bf16.msra.mxu0 %v869
    %889 = vmatprep.subr.bf16.mxu0 0
    %890 = vmatpush1.bf16.msra.mxu0 %v868
    %891 = vmatprep.subr.bf16.mxu0 0
    %892 = vmatpush1.bf16.msra.mxu0 %v867
    %893 = vmatprep.subr.bf16.mxu0 0
    %894 = vmatpush1.bf16.msra.mxu0 %v866
    %895 = vmatprep.subr.bf16.mxu0 0
    %896 = vmatpush1.bf16.msra.mxu0 %v865
    %897 = vmatprep.subr.bf16.mxu0 0
    %898 = vmatpush2.bf16.msra.mxu0 0
    %899 = vmatprep.subr.bf16.mxu0 0
    %900 = vmatpush2.bf16.msra.mxu0 0
    %901 = vmatprep.subr.bf16.mxu0 0
    %902 = vmatpush2.bf16.msra.mxu0 0
    %903 = vmatprep.subr.bf16.mxu0 0
    %904 = vmatpush2.bf16.msra.mxu0 0
    %905 = vmatprep.subr.bf16.mxu0 0
    %906 = vmatpush2.bf16.msra.mxu0 0
    %907 = vmatprep.subr.bf16.mxu0 0
    %908 = vmatpush2.bf16.msra.mxu0 0
    %909 = vmatprep.subr.bf16.mxu0 0
    %910 = vmatpush2.bf16.msra.mxu0 0
    %911 = vmatprep.subr.bf16.mxu0 0
    %912 = vmatpush2.bf16.msra.mxu0 0
    %913 = vmatprep.mubr.bf16.mxu0 0
    %914 = vmatmul.mubr.bf16.gmra.mxu0 %v828
    %v915 = vpop.f32.mrf.mxu0
    %v916 = vadd.f32 %v832, %v915
    %v917 = vpop.f32.mrf.mxu0
    %v918 = vpop.f32.mrf.mxu0
    %v919 = vpop.f32.mrf.mxu0
    %920 = vdwg.mxu0
    %v921 = vsel %vm518, %v916, 0.0
    %922 = vadd.xlane.f32.xlu0 %v921
    %v923 = vpop.xlane.xlu0 %922
    %v924 = vmul.f32 %v923, %v522
    %v925 = vsub.f32 %v916, %v924
    %v926 = vmul.f32 %v925, %v925
    %v927 = vsel %vm518, %v926, 0.0
    %928 = vadd.xlane.f32.xlu0 %v927
    %v929 = vpop.xlane.xlu0 %928
    %v930 = vmul.f32 %v929, %v522
    %v931 = vadd.f32 %v930, 1e-05
    %v932 = vrsqrt.pop %v931
    %v933 = vmul.f32 %v925, %v932
    %v934 = vlaneseq
    %v935 = vshrl.u32 %v934, 7
    %v936 = vsub.s32 2, %v935
    %v937 = vrot.slane %v42, %v936
    %v938 = vmul.f32 %v933, %v937
    %v939 = vlaneseq
    %v940 = vshrl.u32 %v939, 7
    %v941 = vsub.s32 3, %v940
    %v942 = vrot.slane %v42, %v941
    %v943 = vadd.f32 %v938, %v942
    %v944 = vmax.f32 %v943, 0.0
    %v945 = vld [vmem:[%s4] sm:$0xff]
    %v946 = vld [vmem:[%s4 + $0x8] sm:$0xff]
    %v947 = vld [vmem:[%s4 + $0x10] sm:$0xff]
    %v948 = vld [vmem:[%s4 + $0x18] sm:$0xff]
    %v949 = vld [vmem:[%s4 + $0x20] sm:$0xff]
    %v950 = vld [vmem:[%s4 + $0x28] sm:$0xff]
    %v951 = vld [vmem:[%s4 + $0x30] sm:$0xff]
    %v952 = vld [vmem:[%s4 + $0x38] sm:$0xff]
    %v953 = vld [vmem:[%s4 + $0x40] sm:$0xff]
    %v954 = vld [vmem:[%s4 + $0x48] sm:$0xff]
    %v955 = vld [vmem:[%s4 + $0x50] sm:$0xff]
    %v956 = vld [vmem:[%s4 + $0x58] sm:$0xff]
    %v957 = vld [vmem:[%s4 + $0x60] sm:$0xff]
    %v958 = vld [vmem:[%s4 + $0x68] sm:$0xff]
    %v959 = vld [vmem:[%s4 + $0x70] sm:$0xff]
    %v960 = vld [vmem:[%s4 + $0x78] sm:$0xff]
    %v961 = vld [vmem:[%s4 + $0x80] sm:$0xff]
    %v962 = vld [vmem:[%s4 + $0x88] sm:$0xff]
    %v963 = vld [vmem:[%s4 + $0x90] sm:$0xff]
    %v964 = vld [vmem:[%s4 + $0x98] sm:$0xff]
    %v965 = vld [vmem:[%s4 + $0xa0] sm:$0xff]
    %v966 = vld [vmem:[%s4 + $0xa8] sm:$0xff]
    %v967 = vld [vmem:[%s4 + $0xb0] sm:$0xff]
    %v968 = vld [vmem:[%s4 + $0xb8] sm:$0xff]
    %v969 = vld [vmem:[%s4 + $0xc0] sm:$0xff]
    %v970 = vld [vmem:[%s4 + $0xc8] sm:$0xff]
    %v971 = vld [vmem:[%s4 + $0xd0] sm:$0xff]
    %v972 = vld [vmem:[%s4 + $0xd8] sm:$0xff]
    %v973 = vld [vmem:[%s4 + $0xe0] sm:$0xff]
    %v974 = vld [vmem:[%s4 + $0xe8] sm:$0xff]
    %v975 = vld [vmem:[%s4 + $0xf0] sm:$0xff]
    %v976 = vld [vmem:[%s4 + $0xf8] sm:$0xff]
    %v977 = vpack.c.bf16 %v944, %v944
    %v978 = vld [vmem:[%s7] sm:$0xf]
    %v980 = vlaneseq
    %v981 = vshrl.u32 %v980, 7
    %v982 = vsub.s32 0, %v981
    %v983 = vrot.slane %v978, %v982
    %v984 = vlaneseq
    %v985 = vshrl.u32 %v984, 7
    %v986 = vsub.s32 1, %v985
    %v987 = vrot.slane %v978, %v986
    %v988 = vlaneseq
    %v989 = vshrl.u32 %v988, 7
    %v990 = vsub.s32 2, %v989
    %v991 = vrot.slane %v978, %v990
    %v992 = vlaneseq
    %v993 = vshrl.u32 %v992, 7
    %v994 = vsub.s32 3, %v993
    %v995 = vrot.slane %v978, %v994
    %v1032 = vunpack.c.l.b16 %v945
    %v1033 = vunpack.c.h.b16 %v945
    %v1034 = vunpack.c.l.b16 %v946
    %v1035 = vunpack.c.h.b16 %v946
    %v1036 = vunpack.c.l.b16 %v947
    %v1037 = vunpack.c.h.b16 %v947
    %v1038 = vunpack.c.l.b16 %v948
    %v1039 = vunpack.c.h.b16 %v948
    %v1040 = vunpack.c.l.b16 %v949
    %v1041 = vunpack.c.h.b16 %v949
    %v1042 = vunpack.c.l.b16 %v950
    %v1043 = vunpack.c.h.b16 %v950
    %v1044 = vunpack.c.l.b16 %v951
    %v1045 = vunpack.c.h.b16 %v951
    %v1046 = vunpack.c.l.b16 %v952
    %v1047 = vunpack.c.h.b16 %v952
    %v1048 = vunpack.c.l.b16 %v953
    %v1049 = vunpack.c.h.b16 %v953
    %v1050 = vunpack.c.l.b16 %v954
    %v1051 = vunpack.c.h.b16 %v954
    %v1052 = vunpack.c.l.b16 %v955
    %v1053 = vunpack.c.h.b16 %v955
    %v1054 = vunpack.c.l.b16 %v956
    %v1055 = vunpack.c.h.b16 %v956
    %v1056 = vunpack.c.l.b16 %v957
    %v1057 = vunpack.c.h.b16 %v957
    %v1058 = vunpack.c.l.b16 %v958
    %v1059 = vunpack.c.h.b16 %v958
    %v1060 = vunpack.c.l.b16 %v959
    %v1061 = vunpack.c.h.b16 %v959
    %v1062 = vunpack.c.l.b16 %v960
    %v1063 = vunpack.c.h.b16 %v960
    %v1064 = vunpack.c.l.b16 %v961
    %v1065 = vunpack.c.h.b16 %v961
    %v1066 = vunpack.c.l.b16 %v962
    %v1067 = vunpack.c.h.b16 %v962
    %v1068 = vunpack.c.l.b16 %v963
    %v1069 = vunpack.c.h.b16 %v963
    %v1070 = vunpack.c.l.b16 %v964
    %v1071 = vunpack.c.h.b16 %v964
    %v1072 = vunpack.c.l.b16 %v965
    %v1073 = vunpack.c.h.b16 %v965
    %v1074 = vunpack.c.l.b16 %v966
    %v1075 = vunpack.c.h.b16 %v966
    %v1076 = vunpack.c.l.b16 %v967
    %v1077 = vunpack.c.h.b16 %v967
    %v1078 = vunpack.c.l.b16 %v968
    %v1079 = vunpack.c.h.b16 %v968
    %v1080 = vunpack.c.l.b16 %v969
    %v1081 = vunpack.c.h.b16 %v969
    %v1082 = vunpack.c.l.b16 %v970
    %v1083 = vunpack.c.h.b16 %v970
    %v1084 = vunpack.c.l.b16 %v971
    %v1085 = vunpack.c.h.b16 %v971
    %v1086 = vunpack.c.l.b16 %v972
    %v1087 = vunpack.c.h.b16 %v972
    %v1088 = vunpack.c.l.b16 %v973
    %v1089 = vunpack.c.h.b16 %v973
    %v1090 = vunpack.c.l.b16 %v974
    %v1091 = vunpack.c.h.b16 %v974
    %v1092 = vunpack.c.l.b16 %v975
    %v1093 = vunpack.c.h.b16 %v975
    %v1094 = vunpack.c.l.b16 %v976
    %v1095 = vunpack.c.h.b16 %v976
    %v1096 = vpack.c.b16 %v1036, %v1032
    %v1097 = vpack.c.b16 %v1037, %v1033
    %v1098 = vpack.c.b16 %v1038, %v1034
    %v1099 = vpack.c.b16 %v1039, %v1035
    %v1100 = vpack.c.b16 %v1044, %v1040
    %v1101 = vpack.c.b16 %v1045, %v1041
    %v1102 = vpack.c.b16 %v1046, %v1042
    %v1103 = vpack.c.b16 %v1047, %v1043
    %v1104 = vpack.c.b16 %v1052, %v1048
    %v1105 = vpack.c.b16 %v1053, %v1049
    %v1106 = vpack.c.b16 %v1054, %v1050
    %v1107 = vpack.c.b16 %v1055, %v1051
    %v1108 = vpack.c.b16 %v1060, %v1056
    %v1109 = vpack.c.b16 %v1061, %v1057
    %v1110 = vpack.c.b16 %v1062, %v1058
    %v1111 = vpack.c.b16 %v1063, %v1059
    %v1112 = vpack.c.b16 %v1068, %v1064
    %v1113 = vpack.c.b16 %v1069, %v1065
    %v1114 = vpack.c.b16 %v1070, %v1066
    %v1115 = vpack.c.b16 %v1071, %v1067
    %v1116 = vpack.c.b16 %v1076, %v1072
    %v1117 = vpack.c.b16 %v1077, %v1073
    %v1118 = vpack.c.b16 %v1078, %v1074
    %v1119 = vpack.c.b16 %v1079, %v1075
    %v1120 = vpack.c.b16 %v1084, %v1080
    %v1121 = vpack.c.b16 %v1085, %v1081
    %v1122 = vpack.c.b16 %v1086, %v1082
    %v1123 = vpack.c.b16 %v1087, %v1083
    %v1124 = vpack.c.b16 %v1092, %v1088
    %v1125 = vpack.c.b16 %v1093, %v1089
    %v1126 = vpack.c.b16 %v1094, %v1090
    %v1127 = vpack.c.b16 %v1095, %v1091
    %1160 = vmatprep.subr.bf16.mxu0 %v1125
    %1161 = vmatpush1.bf16.msra.mxu0 %v1124
    %1162 = vmatprep.subr.bf16.mxu0 %v1121
    %1163 = vmatpush1.bf16.msra.mxu0 %v1120
    %1164 = vmatprep.subr.bf16.mxu0 %v1117
    %1165 = vmatpush1.bf16.msra.mxu0 %v1116
    %1166 = vmatprep.subr.bf16.mxu0 %v1113
    %1167 = vmatpush1.bf16.msra.mxu0 %v1112
    %1168 = vmatprep.subr.bf16.mxu0 %v1109
    %1169 = vmatpush1.bf16.msra.mxu0 %v1108
    %1170 = vmatprep.subr.bf16.mxu0 %v1105
    %1171 = vmatpush1.bf16.msra.mxu0 %v1104
    %1172 = vmatprep.subr.bf16.mxu0 %v1101
    %1173 = vmatpush1.bf16.msra.mxu0 %v1100
    %1174 = vmatprep.subr.bf16.mxu0 %v1097
    %1175 = vmatpush1.bf16.msra.mxu0 %v1096
    %1176 = vmatprep.subr.bf16.mxu0 0
    %1177 = vmatpush2.bf16.msra.mxu0 0
    %1178 = vmatprep.subr.bf16.mxu0 0
    %1179 = vmatpush2.bf16.msra.mxu0 0
    %1180 = vmatprep.subr.bf16.mxu0 0
    %1181 = vmatpush2.bf16.msra.mxu0 0
    %1182 = vmatprep.subr.bf16.mxu0 0
    %1183 = vmatpush2.bf16.msra.mxu0 0
    %1184 = vmatprep.subr.bf16.mxu0 0
    %1185 = vmatpush2.bf16.msra.mxu0 0
    %1186 = vmatprep.subr.bf16.mxu0 0
    %1187 = vmatpush2.bf16.msra.mxu0 0
    %1188 = vmatprep.subr.bf16.mxu0 0
    %1189 = vmatpush2.bf16.msra.mxu0 0
    %1190 = vmatprep.subr.bf16.mxu0 0
    %1191 = vmatpush2.bf16.msra.mxu0 0
    %1192 = vmatprep.mubr.bf16.mxu0 0
    %1193 = vmatmul.mubr.bf16.gmra.mxu0 %v977
    %v1194 = vpop.f32.mrf.mxu0
    %v1195 = vadd.f32 %v983, %v1194
    %v1196 = vpop.f32.mrf.mxu0
    %v1197 = vadd.f32 %v987, %v1196
    %v1198 = vpop.f32.mrf.mxu0
    %v1199 = vpop.f32.mrf.mxu0
    %1200 = vdwg.mxu0
    %1201 = vmatprep.subr.bf16.mxu0 %v1127
    %1202 = vmatpush1.bf16.msra.mxu0 %v1126
    %1203 = vmatprep.subr.bf16.mxu0 %v1123
    %1204 = vmatpush1.bf16.msra.mxu0 %v1122
    %1205 = vmatprep.subr.bf16.mxu0 %v1119
    %1206 = vmatpush1.bf16.msra.mxu0 %v1118
    %1207 = vmatprep.subr.bf16.mxu0 %v1115
    %1208 = vmatpush1.bf16.msra.mxu0 %v1114
    %1209 = vmatprep.subr.bf16.mxu0 %v1111
    %1210 = vmatpush1.bf16.msra.mxu0 %v1110
    %1211 = vmatprep.subr.bf16.mxu0 %v1107
    %1212 = vmatpush1.bf16.msra.mxu0 %v1106
    %1213 = vmatprep.subr.bf16.mxu0 %v1103
    %1214 = vmatpush1.bf16.msra.mxu0 %v1102
    %1215 = vmatprep.subr.bf16.mxu0 %v1099
    %1216 = vmatpush1.bf16.msra.mxu0 %v1098
    %1217 = vmatprep.subr.bf16.mxu0 0
    %1218 = vmatpush2.bf16.msra.mxu0 0
    %1219 = vmatprep.subr.bf16.mxu0 0
    %1220 = vmatpush2.bf16.msra.mxu0 0
    %1221 = vmatprep.subr.bf16.mxu0 0
    %1222 = vmatpush2.bf16.msra.mxu0 0
    %1223 = vmatprep.subr.bf16.mxu0 0
    %1224 = vmatpush2.bf16.msra.mxu0 0
    %1225 = vmatprep.subr.bf16.mxu0 0
    %1226 = vmatpush2.bf16.msra.mxu0 0
    %1227 = vmatprep.subr.bf16.mxu0 0
    %1228 = vmatpush2.bf16.msra.mxu0 0
    %1229 = vmatprep.subr.bf16.mxu0 0
    %1230 = vmatpush2.bf16.msra.mxu0 0
    %1231 = vmatprep.subr.bf16.mxu0 0
    %1232 = vmatpush2.bf16.msra.mxu0 0
    %1233 = vmatprep.mubr.bf16.mxu0 0
    %1234 = vmatmul.mubr.bf16.gmra.mxu0 %v977
    %v1235 = vpop.f32.mrf.mxu0
    %v1236 = vadd.f32 %v991, %v1235
    %v1237 = vpop.f32.mrf.mxu0
    %v1238 = vadd.f32 %v995, %v1237
    %v1239 = vpop.f32.mrf.mxu0
    %v1240 = vpop.f32.mrf.mxu0
    %1241 = vdwg.mxu0
    %v1242 = vsel %vm518, %v1195, -inf
    %v1243 = vsel %vm518, %v1197, -inf
    %v1244 = vsel %vm518, %v1236, -inf
    %v1245 = vsel %vm518, %v1238, -inf
    %v1246 = vmax.f32 %v1242, %v1243
    %v1247 = vmax.f32 %v1244, %v1245
    %v1248 = vmax.f32 %v1246, %v1247
    %1249 = vmax.xlane.f32.xlu0 %v1248
    %v1250 = vpop.xlane.xlu0 %1249
    %v1251 = vsub.f32 %v1195, %v1250
    %v1252 = vsub.f32 %v1197, %v1250
    %v1253 = vsub.f32 %v1236, %v1250
    %v1254 = vsub.f32 %v1238, %v1250
    %v1255 = vmul.f32 %v1251, 1.442695
    %v1256 = vpow.pop %v1255
    %v1257 = vmul.f32 %v1252, 1.442695
    %v1258 = vpow.pop %v1257
    %v1259 = vmul.f32 %v1253, 1.442695
    %v1260 = vpow.pop %v1259
    %v1261 = vmul.f32 %v1254, 1.442695
    %v1262 = vpow.pop %v1261
    %v1263 = vsel %vm518, %v1256, 0.0
    %v1264 = vsel %vm518, %v1258, 0.0
    %v1265 = vadd.f32 %v1263, %v1264
    %v1266 = vsel %vm518, %v1260, 0.0
    %v1267 = vadd.f32 %v1265, %v1266
    %v1268 = vsel %vm518, %v1262, 0.0
    %v1269 = vadd.f32 %v1267, %v1268
    %1270 = vadd.xlane.f32.xlu0 %v1269
    %v1271 = vpop.xlane.xlu0 %1270
    %v1272 = vrcp.pop %v1271
    %v1273 = vmul.f32 %v1256, %v1272
    %v1274 = vmul.f32 %v1258, %v1272
    %v1275 = vmul.f32 %v1260, %v1272
    %v1276 = vmul.f32 %v1262, %v1272
    %v1281 = vcombine.low %v1273, %v1274
    %v1282 = vcombine.low %v1275, %v1276
    %1285 = vst [vmem:[#allocation2] sm:$0xff] %v1281
    %1286 = vst [vmem:[#allocation2 + $0x8] sm:$0xff] %v1282
    %v1287 = vlaneseq
    %v1288 = vshrl.u32 %v1287, 7
    %v1289 = vsub.s32 0, %v1288
    %v1290 = vrot.slane %v43, %v1289
    %v1291 = vadd.f32 %v509, %v1290
    %v1292 = vsel %vm393, %v1291, 0.0
    %1293 = vadd.xlane.f32.xlu0 %v1292
    %v1294 = vpop.xlane.xlu0 %1293
    %v1295 = vmul.f32 %v1294, %v397
    %v1296 = vsub.f32 %v1291, %v1295
    %v1297 = vmul.f32 %v1296, %v1296
    %v1298 = vsel %vm393, %v1297, 0.0
    %1299 = vadd.xlane.f32.xlu0 %v1298
    %v1300 = vpop.xlane.xlu0 %1299
    %v1301 = vmul.f32 %v1300, %v397
    %v1302 = vadd.f32 %v1301, 1e-05
    %v1303 = vrsqrt.pop %v1302
    %v1304 = vmul.f32 %v1296, %v1303
    %v1305 = vlaneseq
    %v1306 = vshrl.u32 %v1305, 7
    %v1307 = vsub.s32 1, %v1306
    %v1308 = vrot.slane %v43, %v1307
    %v1309 = vmul.f32 %v1304, %v1308
    %v1310 = vlaneseq
    %v1311 = vshrl.u32 %v1310, 7
    %v1312 = vsub.s32 2, %v1311
    %v1313 = vrot.slane %v43, %v1312
    %v1314 = vadd.f32 %v1309, %v1313
    %v1315 = vmax.f32 %v1314, 0.0
    %v1316 = vld [vmem:[%s5] sm:$0xf]
    %v1317 = vld [vmem:[%s5 + $0x4] sm:$0xf]
    %v1318 = vld [vmem:[%s5 + $0x8] sm:$0xf]
    %v1319 = vld [vmem:[%s5 + $0xc] sm:$0xf]
    %v1320 = vld [vmem:[%s5 + $0x10] sm:$0xf]
    %v1321 = vld [vmem:[%s5 + $0x14] sm:$0xf]
    %v1322 = vld [vmem:[%s5 + $0x18] sm:$0xf]
    %v1323 = vld [vmem:[%s5 + $0x1c] sm:$0xf]
    %v1324 = vpack.c.bf16 %v1315, %v1315
    %v1325 = vlaneseq
    %v1326 = vshrl.u32 %v1325, 7
    %v1327 = vsub.s32 3, %v1326
    %v1328 = vrot.slane %v43, %v1327
    %v1337 = vunpack.c.l.b16 %v1316
    %v1338 = vunpack.c.l.b16 %v1317
    %v1339 = vunpack.c.l.b16 %v1318
    %v1340 = vunpack.c.l.b16 %v1319
    %v1341 = vunpack.c.l.b16 %v1320
    %v1342 = vunpack.c.l.b16 %v1321
    %v1343 = vunpack.c.l.b16 %v1322
    %v1344 = vunpack.c.l.b16 %v1323
    %v1345 = vpack.c.b16 %v1338, %v1337
    %v1346 = vpack.c.b16 %v1340, %v1339
    %v1347 = vpack.c.b16 %v1342, %v1341
    %v1348 = vpack.c.b16 %v1344, %v1343
    %v1354 = vsel %vm468, %v1324, 0
    %1356 = vmatprep.subr.bf16.mxu0 0
    %1357 = vmatpush1.bf16.msra.mxu0 0
    %1358 = vmatprep.subr.bf16.mxu0 0
    %1359 = vmatpush1.bf16.msra.mxu0 0
    %1360 = vmatprep.subr.bf16.mxu0 0
    %1361 = vmatpush1.bf16.msra.mxu0 0
    %1362 = vmatprep.subr.bf16.mxu0 0
    %1363 = vmatpush1.bf16.msra.mxu0 0
    %1364 = vmatprep.subr.bf16.mxu0 0
    %1365 = vmatpush1.bf16.msra.mxu0 %v1348
    %1366 = vmatprep.subr.bf16.mxu0 0
    %1367 = vmatpush1.bf16.msra.mxu0 %v1347
    %1368 = vmatprep.subr.bf16.mxu0 0
    %1369 = vmatpush1.bf16.msra.mxu0 %v1346
    %1370 = vmatprep.subr.bf16.mxu0 0
    %1371 = vmatpush1.bf16.msra.mxu0 %v1345
    %1372 = vmatprep.subr.bf16.mxu0 0
    %1373 = vmatpush2.bf16.msra.mxu0 0
    %1374 = vmatprep.subr.bf16.mxu0 0
    %1375 = vmatpush2.bf16.msra.mxu0 0
    %1376 = vmatprep.subr.bf16.mxu0 0
    %1377 = vmatpush2.bf16.msra.mxu0 0
    %1378 = vmatprep.subr.bf16.mxu0 0
    %1379 = vmatpush2.bf16.msra.mxu0 0
    %1380 = vmatprep.subr.bf16.mxu0 0
    %1381 = vmatpush2.bf16.msra.mxu0 0
    %1382 = vmatprep.subr.bf16.mxu0 0
    %1383 = vmatpush2.bf16.msra.mxu0 0
    %1384 = vmatprep.subr.bf16.mxu0 0
    %1385 = vmatpush2.bf16.msra.mxu0 0
    %1386 = vmatprep.subr.bf16.mxu0 0
    %1387 = vmatpush2.bf16.msra.mxu0 0
    %1388 = vmatprep.mubr.bf16.mxu0 0
    %1389 = vmatmul.mubr.bf16.gmra.mxu0 %v1354
    %v1390 = vpop.f32.mrf.mxu0
    %v1391 = vadd.f32 %v1328, %v1390
    %v1392 = vpop.f32.mrf.mxu0
    %v1393 = vpop.f32.mrf.mxu0
    %v1394 = vpop.f32.mrf.mxu0
    %1395 = vdwg.mxu0
    %v1396 = vsel %vm393, %v1391, 0.0
    %1397 = vadd.xlane.f32.xlu0 %v1396
    %v1398 = vpop.xlane.xlu0 %1397
    %v1399 = vmul.f32 %v1398, %v397
    %v1400 = vsub.f32 %v1391, %v1399
    %v1401 = vmul.f32 %v1400, %v1400
    %v1402 = vsel %vm393, %v1401, 0.0
    %1403 = vadd.xlane.f32.xlu0 %v1402
    %v1404 = vpop.xlane.xlu0 %1403
    %v1405 = vmul.f32 %v1404, %v397
    %v1406 = vadd.f32 %v1405, 1e-05
    %v1407 = vrsqrt.pop %v1406
    %v1408 = vmul.f32 %v1400, %v1407
    %v1409 = vlaneseq
    %v1410 = vshrl.u32 %v1409, 7
    %v1411 = vsub.s32 4, %v1410
    %v1412 = vrot.slane %v43, %v1411
    %v1413 = vmul.f32 %v1408, %v1412
    %v1414 = vlaneseq
    %v1415 = vshrl.u32 %v1414, 7
    %v1416 = vsub.s32 5, %v1415
    %v1417 = vrot.slane %v43, %v1416
    %v1418 = vadd.f32 %v1413, %v1417
    %v1419 = vmax.f32 %v1418, 0.0
    %s1420 = scalar_lea.vmem %s5, 32
    %v1421 = vld [vmem:[%s1420] sm:$0xf]
    %v1422 = vld [vmem:[%s1420 + $0x4] sm:$0xf]
    %v1423 = vld [vmem:[%s1420 + $0x8] sm:$0xf]
    %v1424 = vld [vmem:[%s1420 + $0xc] sm:$0xf]
    %v1425 = vld [vmem:[%s1420 + $0x10] sm:$0xf]
    %v1426 = vld [vmem:[%s1420 + $0x14] sm:$0xf]
    %v1427 = vld [vmem:[%s1420 + $0x18] sm:$0xf]
    %v1428 = vld [vmem:[%s1420 + $0x1c] sm:$0xf]
    %v1429 = vpack.c.bf16 %v1419, %v1419
    %v1430 = vlaneseq
    %v1431 = vshrl.u32 %v1430, 7
    %v1432 = vsub.s32 6, %v1431
    %v1433 = vrot.slane %v43, %v1432
    %v1442 = vunpack.c.l.b16 %v1421
    %v1443 = vunpack.c.l.b16 %v1422
    %v1444 = vunpack.c.l.b16 %v1423
    %v1445 = vunpack.c.l.b16 %v1424
    %v1446 = vunpack.c.l.b16 %v1425
    %v1447 = vunpack.c.l.b16 %v1426
    %v1448 = vunpack.c.l.b16 %v1427
    %v1449 = vunpack.c.l.b16 %v1428
    %v1450 = vpack.c.b16 %v1443, %v1442
    %v1451 = vpack.c.b16 %v1445, %v1444
    %v1452 = vpack.c.b16 %v1447, %v1446
    %v1453 = vpack.c.b16 %v1449, %v1448
    %v1459 = vsel %vm468, %v1429, 0
    %1461 = vmatprep.subr.bf16.mxu0 0
    %1462 = vmatpush1.bf16.msra.mxu0 0
    %1463 = vmatprep.subr.bf16.mxu0 0
    %1464 = vmatpush1.bf16.msra.mxu0 0
    %1465 = vmatprep.subr.bf16.mxu0 0
    %1466 = vmatpush1.bf16.msra.mxu0 0
    %1467 = vmatprep.subr.bf16.mxu0 0
    %1468 = vmatpush1.bf16.msra.mxu0 0
    %1469 = vmatprep.subr.bf16.mxu0 0
    %1470 = vmatpush1.bf16.msra.mxu0 %v1453
    %1471 = vmatprep.subr.bf16.mxu0 0
    %1472 = vmatpush1.bf16.msra.mxu0 %v1452
    %1473 = vmatprep.subr.bf16.mxu0 0
    %1474 = vmatpush1.bf16.msra.mxu0 %v1451
    %1475 = vmatprep.subr.bf16.mxu0 0
    %1476 = vmatpush1.bf16.msra.mxu0 %v1450
    %1477 = vmatprep.subr.bf16.mxu0 0
    %1478 = vmatpush2.bf16.msra.mxu0 0
    %1479 = vmatprep.subr.bf16.mxu0 0
    %1480 = vmatpush2.bf16.msra.mxu0 0
    %1481 = vmatprep.subr.bf16.mxu0 0
    %1482 = vmatpush2.bf16.msra.mxu0 0
    %1483 = vmatprep.subr.bf16.mxu0 0
    %1484 = vmatpush2.bf16.msra.mxu0 0
    %1485 = vmatprep.subr.bf16.mxu0 0
    %1486 = vmatpush2.bf16.msra.mxu0 0
    %1487 = vmatprep.subr.bf16.mxu0 0
    %1488 = vmatpush2.bf16.msra.mxu0 0
    %1489 = vmatprep.subr.bf16.mxu0 0
    %1490 = vmatpush2.bf16.msra.mxu0 0
    %1491 = vmatprep.subr.bf16.mxu0 0
    %1492 = vmatpush2.bf16.msra.mxu0 0
    %1493 = vmatprep.mubr.bf16.mxu0 0
    %1494 = vmatmul.mubr.bf16.gmra.mxu0 %v1459
    %v1495 = vpop.f32.mrf.mxu0
    %v1496 = vadd.f32 %v1433, %v1495
    %v1497 = vpop.f32.mrf.mxu0
    %v1498 = vpop.f32.mrf.mxu0
    %v1499 = vpop.f32.mrf.mxu0
    %1500 = vdwg.mxu0
    %v1501 = vsel %vm393, %v1496, 0.0
    %1502 = vadd.xlane.f32.xlu0 %v1501
    %v1503 = vpop.xlane.xlu0 %1502
    %v1504 = vmul.f32 %v1503, %v397
    %v1505 = vsub.f32 %v1496, %v1504
    %v1506 = vmul.f32 %v1505, %v1505
    %v1507 = vsel %vm393, %v1506, 0.0
    %1508 = vadd.xlane.f32.xlu0 %v1507
    %v1509 = vpop.xlane.xlu0 %1508
    %v1510 = vmul.f32 %v1509, %v397
    %v1511 = vadd.f32 %v1510, 1e-05
    %v1512 = vrsqrt.pop %v1511
    %v1513 = vmul.f32 %v1505, %v1512
    %v1514 = vlaneseq
    %v1515 = vshrl.u32 %v1514, 7
    %v1516 = vsub.s32 7, %v1515
    %v1517 = vrot.slane %v43, %v1516
    %v1518 = vmul.f32 %v1513, %v1517
    %v1519 = vlaneseq
    %v1520 = vshrl.u32 %v1519, 7
    %v1521 = vsub.s32 0, %v1520
    %v1522 = vrot.slane %v44, %v1521
    %v1523 = vadd.f32 %v1518, %v1522
    %v1524 = vadd.f32 %v1315, %v1523
    %v1525 = vlaneseq
    %v1526 = vshrl.u32 %v1525, 7
    %v1527 = vsub.s32 1, %v1526
    %v1528 = vrot.slane %v44, %v1527
    %v1529 = vmul.f32 %v1524, %v1528
    %v1530 = vsel %vm393, %v1529, 0.0
    %1531 = vadd.xlane.f32.xlu0 %v1530
    %v1532 = vpop.xlane.xlu0 %1531
    %v1533 = vlaneseq
    %v1534 = vshrl.u32 %v1533, 7
    %v1535 = vsub.s32 2, %v1534
    %v1536 = vrot.slane %v44, %v1535
    %v1537 = vadd.f32 %v1532, %v1536
    %1539 = vset.pattern.permute.xlu0 0
    %1540 = vperm.xlu0 %1539, %v1537
    %v1541 = vpop.permute.xlu0 %1540
    %1543 = vst [vmem:[%s11] sm:$0xf] %v1541
    // Predicated region
    $region42: #{next_basket_predictor_forward.1} parent=1 // pred_check
      _
    $region43: #{next_basket_predictor_forward.1} parent=1 // pred_check_branch
      %1545 = sbr.rel (0) target = $region45
    $region44: #{next_basket_predictor_forward.1} parent=1 // pred_region
      %s1547 = ssub.s32 256, 256
      %1548 = vsyncadd [#allocation3], %s1547
      %s1550 = sshll.u32 [#allocation2], 4
      %s1551 = int_to_ptr.vmem [resolvable:$true] %s1550
      %1553 = dma.vmem_to_hbm [thread:$0]  %s1551, 256, %s10, [#allocation3]
    $region45: #{next_basket_predictor_forward.1} parent=1 // pred_fallthru
      _
    // Predicated region
    $region46: #{next_basket_predictor_forward.1} parent=1 // pred_check
      _
    $region47: #{next_basket_predictor_forward.1} parent=1 // pred_check_branch
      %1555 = sbr.rel (0) target = $region49
    $region48: #{next_basket_predictor_forward.1} parent=1 // pred_region
      _
    $region49: #{next_basket_predictor_forward.1} parent=1 // pred_fallthru
      _
    // Predicated region
    $region50: #{next_basket_predictor_forward.1} parent=1 // pred_check
      _
    $region51: #{next_basket_predictor_forward.1} parent=1 // pred_check_branch
      %1557 = sbr.rel (0) target = $region53
    $region52: #{next_basket_predictor_forward.1} parent=1 // pred_region
      %1558 = dma.done [#allocation3], 256
    $region53: #{next_basket_predictor_forward.1} parent=1 // pred_fallthru
      _
    // Predicated region
    $region54: #{next_basket_predictor_forward.1} parent=1 // pred_check
      _
    $region55: #{next_basket_predictor_forward.1} parent=1 // pred_check_branch
      %1560 = sbr.rel (0) target = $region57
    $region56: #{next_basket_predictor_forward.1} parent=1 // pred_region
      _
    $region57: #{next_basket_predictor_forward.1} parent=1 // pred_fallthru
      _
    %1561 = vsyncpa [#allocation3], 1

</llo_original>
